<compile_context>
chip_gen: v7x
topology: tpu7x:2x2x1
jax: 0.10.0
libtpu: 0.0.40
codegen_flags: <defaults>
</compile_context>

<pallas_src>
import functools

import jax
import jax.numpy as jnp
from jax import lax
from jax.experimental import pallas as pl
from jax.experimental.pallas import tpu as pltpu

# Explicit VMEM budget (well inside v5e/v6e's 128 MiB and v7x's 64 MiB).
_CP = pltpu.CompilerParams(
    dimension_semantics=("parallel",),
    vmem_limit_bytes=32 * 1024 * 1024,
)


# ----------------------------- Pallas kernels ------------------------------

def _conv_bn_kernel(x_ref, w_ref, s_ref, b_ref, *rest, ks, relu, has_skip):
    """Fused k x k (unit-stride) conv + affine [+ skip add] [+ ReLU].

    x_ref : (Hp, Wp, Cin)      padded activation block, bf16, VMEM-resident
    w_ref : (ks*ks*Cin, Cout)  weights, bf16
    s_ref : (1, Cout) f32      folded BN scale (ones for bias-only convs)
    b_ref : (1, Cout) f32      folded BN shift / bias
    skip  : (Ho, Wo, Cout)     optional fused residual / merge input
    o_ref : (Ho, Wo, Cout)

    The k*k taps are formed in-kernel from the VMEM block (no HBM im2col).
    The matmul runs per output row: at real CenterNet sizes Wo ~ 128 so each
    dot is a full MXU tile; at the demo sizes it is simply small.
    """
    if has_skip:
        skip_ref, o_ref = rest
    else:
        (o_ref,) = rest
        skip_ref = None
    ho, wo, cout = o_ref.shape
    cin = x_ref.shape[-1]
    scale = s_ref[...]
    shift = b_ref[...]

    def body(y, carry):
        acc = jnp.zeros((wo, cout), jnp.float32)
        for t in range(ks * ks):
            dy, dx = t // ks, t % ks
            tap = x_ref[y + dy, dx:dx + wo, :]                       # (Wo, Cin)
            acc = acc + jnp.dot(tap, w_ref[t * cin:(t + 1) * cin, :],
                                preferred_element_type=jnp.float32)
        row = acc * scale + shift
        if has_skip:
            row = row + skip_ref[y, :, :].astype(jnp.float32)
        if relu:
            row = jnp.maximum(row, 0.0)
        o_ref[y, :, :] = row.astype(o_ref.dtype)
        return carry

    lax.fori_loop(0, ho, body, 0)


def _mm_affine_kernel(x_ref, w_ref, s_ref, b_ref, *rest, relu, has_skip):
    """Row-tiled matmul + affine [+ skip add] [+ ReLU] (all 1x1 convs)."""
    if has_skip:
        skip_ref, o_ref = rest
    else:
        (o_ref,) = rest
        skip_ref = None
    y = jnp.dot(x_ref[...], w_ref[...], preferred_element_type=jnp.float32)
    y = y * s_ref[...] + b_ref[...]
    if has_skip:
        y = y + skip_ref[...].astype(jnp.float32)
    if relu:
        y = jnp.maximum(y, 0.0)
    o_ref[...] = y.astype(o_ref.dtype)


def _merge_up_kernel(a_ref, b_ref, o_ref):
    """o = a + nearest-2x-upsample(b) for the hourglass merge.

    `a`/`o` arrive in the W-paired layout (H, W/2, 2C) (free wrapper reshape),
    so the W-direction repeat of `b` is just writing the same values into both
    channel halves; the H-direction repeat is a leading-dim broadcast.
    """
    h, w, c = b_ref.shape
    b = b_ref[...].astype(jnp.float32)
    b2 = jnp.broadcast_to(b[:, None], (h, 2, w, c)).reshape(2 * h, w, c)
    a = a_ref[...].astype(jnp.float32)
    o_ref[:, :, 0:c] = (a[:, :, 0:c] + b2).astype(o_ref.dtype)
    o_ref[:, :, c:2 * c] = (a[:, :, c:2 * c] + b2).astype(o_ref.dtype)


# ----------------------------- Conv wrappers --------------------------------

def _conv_1x1(p, x, stride, relu, skip, out_dtype):
    """1x1 conv as a row-tiled flat matmul over M = N*H*W rows."""
    if stride == 2:
        x = x[:, ::2, ::2, :]                 # cheap subsample (output-sized copy)
    n, h, wd, cin = x.shape
    cout = p['w'].shape[-1]
    m = n * h * wd
    x2 = x.reshape(m, cin)                    # free reshape (contiguous dims)
    wmat = p['w'].reshape(cin, cout)

    tm = m                                    # >= 2 row blocks when possible (v7x: 2 TCs)
    for cand in (256, 128, 64, 32, 16, 8):
        if m % cand == 0 and m // cand >= 2:
            tm = cand
            break

    kfn = functools.partial(_mm_affine_kernel, relu=relu, has_skip=skip is not None)
    in_specs = [
        pl.BlockSpec((tm, cin), lambda i: (i, 0)),
        pl.BlockSpec((cin, cout), lambda i: (0, 0)),
        pl.BlockSpec((1, cout), lambda i: (0, 0)),
        pl.BlockSpec((1, cout), lambda i: (0, 0)),
    ]
    args = [x2.astype(jnp.bfloat16), wmat.astype(jnp.bfloat16),
            p['scale'].reshape(1, cout).astype(jnp.float32),
            p['shift'].reshape(1, cout).astype(jnp.float32)]
    if skip is not None:
        in_specs.append(pl.BlockSpec((tm, cout), lambda i: (i, 0)))
        args.append(skip.reshape(m, cout).astype(jnp.bfloat16))

    out = pl.pallas_call(
        kfn,
        out_shape=jax.ShapeDtypeStruct((m, cout), out_dtype),
        grid=(m // tm,),
        in_specs=in_specs,
        out_specs=pl.BlockSpec((tm, cout), lambda i: (i, 0)),
        compiler_params=_CP,
    )(*args)
    return out.reshape(n, h, wd, cout)


def _conv_spatial(p, x, stride, relu, skip, out_dtype):
    """k x k conv (k >= 2), stride 1 or 2, SAME-style padding."""
    k = int(p['k'])
    pad = (k - 1) // 2
    wgt = p['w']                               # (k, k, Cin, Cout)
    n = x.shape[0]
    cin = x.shape[-1]
    cout = wgt.shape[-1]
    if pad:
        x = jnp.pad(x, ((0, 0), (pad, pad), (pad, pad), (0, 0)))
    hp, wp = x.shape[1], x.shape[2]

    if stride == 1:
        ks = k
        ho, wo = hp - k + 1, wp - k + 1
        xk = x
        wmat = wgt.reshape(k * k * cin, cout)
    else:
        # stride 2: space-to-depth (one cheap XLA transpose of the activation)
        # plus a weight remap turns it into a unit-stride ks x ks conv.
        assert stride == 2 and hp % 2 == 0 and wp % 2 == 0
        ks = (k + 1) // 2
        ho, wo = (hp - k) // 2 + 1, (wp - k) // 2 + 1
        hs, ws = hp // 2, wp // 2
        xk = x.reshape(n, hs, 2, ws, 2, cin).transpose(0, 1, 3, 2, 4, 5)
        xk = xk.reshape(n, hs, ws, 4 * cin)
        w6 = jnp.pad(wgt, ((0, 2 * ks - k), (0, 2 * ks - k), (0, 0), (0, 0)))
        w6 = w6.reshape(ks, 2, ks, 2, cin, cout).transpose(0, 2, 1, 3, 4, 5)
        wmat = w6.reshape(ks * ks * 4 * cin, cout)

    hs, ws, cin_eff = xk.shape[1], xk.shape[2], xk.shape[3]
    kfn = functools.partial(_conv_bn_kernel, ks=ks, relu=relu,
                            has_skip=skip is not None)
    in_specs = [
        pl.BlockSpec((None, hs, ws, cin_eff), lambda b: (b, 0, 0, 0)),
        pl.BlockSpec((wmat.shape[0], cout), lambda b: (0, 0)),
        pl.BlockSpec((1, cout), lambda b: (0, 0)),
        pl.BlockSpec((1, cout), lambda b: (0, 0)),
    ]
    args = [xk.astype(jnp.bfloat16), wmat.astype(jnp.bfloat16),
            p['scale'].reshape(1, cout).astype(jnp.float32),
            p['shift'].reshape(1, cout).astype(jnp.float32)]
    if skip is not None:
        in_specs.append(pl.BlockSpec((None, ho, wo, cout), lambda b: (b, 0, 0, 0)))
        args.append(skip.astype(jnp.bfloat16))

    return pl.pallas_call(
        kfn,
        out_shape=jax.ShapeDtypeStruct((n, ho, wo, cout), out_dtype),
        grid=(n,),
        in_specs=in_specs,
        out_specs=pl.BlockSpec((None, ho, wo, cout), lambda b: (b, 0, 0, 0)),
        compiler_params=_CP,
    )(*args)


def conv_bn(p, x, stride=1, relu=False, skip=None, out_dtype=jnp.bfloat16):
    """k x k conv + folded BN affine / bias, optionally fused skip-add + ReLU."""
    if p['k'] == 1:
        return _conv_1x1(p, x, stride, relu, skip, out_dtype)
    return _conv_spatial(p, x, stride, relu, skip, out_dtype)


def merge_upsample(a, b):
    """a + Upsample(scale_factor=2, mode='nearest')(b): hourglass merge kernel."""
    n, h, w, c = a.shape
    assert h % 2 == 0 and w % 2 == 0
    a2 = a.reshape(n, h, w // 2, 2 * c)        # free reshape (contiguous dims)
    out = pl.pallas_call(
        _merge_up_kernel,
        out_shape=jax.ShapeDtypeStruct((n, h, w // 2, 2 * c), a.dtype),
        grid=(n,),
        in_specs=[pl.BlockSpec((None, h, w // 2, 2 * c), lambda i: (i, 0, 0, 0)),
                  pl.BlockSpec((None, h // 2, w // 2, c), lambda i: (i, 0, 0, 0))],
        out_specs=pl.BlockSpec((None, h, w // 2, 2 * c), lambda i: (i, 0, 0, 0)),
        compiler_params=_CP,
    )(a2, b)
    return out.reshape(n, h, w, c)


# ----------------------------- Layers ----------------------------------------

def residual_fwd(p, x):
    s = p['stride']
    out1 = conv_bn(p['conv1'], x, stride=s, relu=True)          # conv3x3 + BN + ReLU
    skip = conv_bn(p['skip'], x, stride=s, relu=False) if 'skip' in p else x
    # conv3x3 + BN + (skip add) + ReLU fused in one kernel epilogue
    return conv_bn(p['conv2'], out1, stride=1, relu=True, skip=skip)


def run_residuals(plist, x):
    for rp in plist:
        x = residual_fwd(rp, x)
    return x


def kp_forward(p, x):
    up1 = run_residuals(p['up1'], x)
    low1 = run_residuals(p['low1'], x)                  # first residual has stride 2
    low2 = kp_forward(p['low2'], low1) if p['nested'] else run_residuals(p['low2'], low1)
    low3 = run_residuals(p['low3'], low2)
    return merge_upsample(up1, low3)                    # up1 + nearest-2x(low3), fused


# ----------------------------- Parameter init --------------------------------

_KEYS = iter(jax.random.split(jax.random.PRNGKey(0), 8192))


def nkey():
    return next(_KEYS)


def init_convolution(cin, cout, k, with_bn=True, bias_fill=None):
    w = jax.random.normal(nkey(), (k, k, cin, cout), jnp.float32) / jnp.sqrt(
        jnp.float32(k * k * cin))
    if with_bn:
        gamma = 1.0 + 0.1 * jax.random.normal(nkey(), (cout,), jnp.float32)
        beta = 0.1 * jax.random.normal(nkey(), (cout,), jnp.float32)
        running_mean = jnp.zeros((cout,), jnp.float32)
        running_var = jnp.ones((cout,), jnp.float32)
        scale = gamma / jnp.sqrt(running_var + 1e-5)
        shift = beta - running_mean * scale
    else:
        scale = jnp.ones((cout,), jnp.float32)
        if bias_fill is not None:
            shift = jnp.full((cout,), bias_fill, jnp.float32)
        else:
            shift = 0.1 * jax.random.normal(nkey(), (cout,), jnp.float32)
    return {'w': w, 'scale': scale, 'shift': shift, 'k': k}


def init_residual(cin, cout, stride=1):
    p = {'conv1': init_convolution(cin, cout, 3),
         'conv2': init_convolution(cout, cout, 3),
         'stride': stride}
    if stride != 1 or cin != cout:
        p['skip'] = init_convolution(cin, cout, 1)
    return p


def init_kp(n, dims, modules):
    curr_mod, next_mod = modules[0], modules[1]
    curr_dim, next_dim = dims[0], dims[1]
    p = {}
    p['up1'] = [init_residual(curr_dim, curr_dim) for _ in range(curr_mod)]
    # make_hg_layer: first residual stride=2 curr->next, then curr_mod-1 next->next
    p['low1'] = ([init_residual(curr_dim, next_dim, stride=2)] +
                 [init_residual(next_dim, next_dim) for _ in range(curr_mod - 1)])
    if n > 1:
        p['low2'] = init_kp(n - 1, dims[1:], modules[1:])
        p['nested'] = True
    else:
        p['low2'] = [init_residual(next_dim, next_dim) for _ in range(next_mod)]
        p['nested'] = False
    # make_layer_revr: curr_mod-1 residuals next->next, then one next->curr
    p['low3'] = ([init_residual(next_dim, next_dim) for _ in range(curr_mod - 1)] +
                 [init_residual(next_dim, curr_dim)])
    return p


def init_heads_fused(heads, cnv_dim, curr_dim):
    """Fuse all heads: one 3x3 conv (n_heads*curr_dim out) + one block-diagonal 1x1."""
    names = list(heads.keys())
    sizes = [heads[h] for h in names]
    total = sum(sizes)
    nh = len(names)
    cnv_w, cnv_b, out_b = [], [], []
    out_w = jnp.zeros((nh * curr_dim, total), jnp.float32)
    off = 0
    for i, name in enumerate(names):
        c = init_convolution(cnv_dim, curr_dim, 3, with_bn=False)
        o = init_convolution(curr_dim, heads[name], 1, with_bn=False,
                             bias_fill=-2.19 if 'hm' in name else None)
        cnv_w.append(c['w'])
        cnv_b.append(c['shift'])
        out_b.append(o['shift'])
        out_w = out_w.at[i * curr_dim:(i + 1) * curr_dim,
                         off:off + heads[name]].set(o['w'].reshape(curr_dim, heads[name]))
        off += heads[name]
    return {
        'cnv': {'w': jnp.concatenate(cnv_w, axis=-1),
                'scale': jnp.ones((nh * curr_dim,), jnp.float32),
                'shift': jnp.concatenate(cnv_b), 'k': 3},
        'out': {'w': out_w.reshape(1, 1, nh * curr_dim, total),
                'scale': jnp.ones((total,), jnp.float32),
                'shift': jnp.concatenate(out_b), 'k': 1},
        'names': names, 'sizes': sizes,
    }


def init_centernet(cfg):
    heads, nstack, n = cfg['heads'], cfg['num_stacks'], cfg['n']
    channels, modules, cnv_dim = cfg['channels'], cfg['modules'], cfg['cnv_dim']
    pre_dim = cfg['pre_dim']
    curr_dim = channels[0]
    return {
        'pre_conv': init_convolution(3, pre_dim, 7),                 # 7x7/2 + BN + ReLU
        'pre_res': init_residual(pre_dim, curr_dim, stride=2),
        'kps': [init_kp(n, channels, modules) for _ in range(nstack)],
        'cnvs': [init_convolution(curr_dim, cnv_dim, 3) for _ in range(nstack)],
        'inters': [init_residual(curr_dim, curr_dim) for _ in range(nstack - 1)],
        'inters_': [init_convolution(curr_dim, curr_dim, 1) for _ in range(nstack - 1)],
        'cnvs_': [init_convolution(cnv_dim, curr_dim, 1) for _ in range(nstack - 1)],
        'heads': [init_heads_fused(heads, cnv_dim, curr_dim) for _ in range(nstack)],
    }


# ----------------------------- Forward ---------------------------------------

def centernet_forward(params, image_nchw, cfg):
    x = jnp.transpose(image_nchw, (0, 2, 3, 1)).astype(jnp.bfloat16)   # NCHW -> NHWC
    inter = conv_bn(params['pre_conv'], x, stride=2, relu=True)
    inter = residual_fwd(params['pre_res'], inter)

    nstack = cfg['num_stacks']
    outs = []
    for ind in range(nstack):
        kp = kp_forward(params['kps'][ind], inter)
        cnv = conv_bn(params['cnvs'][ind], kp, stride=1, relu=True)

        if ind < nstack - 1:
            a = conv_bn(params['inters_'][ind], inter, stride=1, relu=False)   # 1x1 + BN
            # 1x1 + BN on cnv, fused with "+ a" and ReLU (intermediate merge)
            inter = conv_bn(params['cnvs_'][ind], cnv, stride=1, relu=True, skip=a)
            inter = residual_fwd(params['inters'][ind], inter)

        hp = params['heads'][ind]
        h = conv_bn(hp['cnv'], cnv, stride=1, relu=True)               # fused 3x3 heads + ReLU
        ho = conv_bn(hp['out'], h, stride=1, relu=False,
                     out_dtype=jnp.float32)                            # fused 1x1 heads
        out, off = {}, 0
        for name, sz in zip(hp['names'], hp['sizes']):
            out[name] = jnp.transpose(ho[..., off:off + sz], (0, 3, 1, 2))  # back to NCHW
            off += sz
        outs.append(out)
    return outs


# ----------------------------- Demo -------------------------------------------

if __name__ == "__main__":
    # Small config consistent with the module's structure (scaled-down hourglass).
    cfg = dict(
        heads={'hm': 8, 'wh': 2, 'reg': 2},
        num_stacks=2,
        n=2,
        cnv_dim=16,
        channels=[16, 16, 32],
        modules=[1, 1, 1],
        pre_dim=8,
    )
    params = init_centernet(cfg)

    image = jax.random.normal(jax.random.PRNGKey(0), (2, 3, 32, 32), jnp.float32)

    outs = centernet_forward(params, image, cfg)
    jax.block_until_ready(jax.tree_util.tree_leaves(outs))

    # sanity: two stacks, each with hm/wh/reg heads at 1/4 resolution
    assert len(outs) == cfg['num_stacks']
    assert outs[0]['hm'].shape == (2, 8, 8, 8)
    assert outs[0]['wh'].shape == (2, 2, 8, 8)
    assert outs[0]['reg'].shape == (2, 2, 8, 8)
    assert bool(jnp.all(jnp.isfinite(outs[-1]['hm'])))

    print("KERNEL_OK")
</pallas_src>

<mosaic_0001>
module attributes {stable_mosaic.version = 11 : i64} {
  func.func @_conv_bn_kernel(%arg0: i32, %arg1: memref<1x19x19x12xbf16, #tpu.memory_space<vmem>>, %arg2: memref<192x8xbf16, #tpu.memory_space<vmem>>, %arg3: memref<1x8xf32, #tpu.memory_space<vmem>>, %arg4: memref<1x8xf32, #tpu.memory_space<vmem>>, %arg5: memref<1x16x16x8xbf16, #tpu.memory_space<vmem>>) attributes {dimension_semantics = [#tpu.dimension_semantics<parallel>], iteration_bounds = array<i64: 2>, scalar_prefetch = 0 : i64, scratch_operands = 0 : i64, tpu.core_type = #tpu.core_type<tc>, window_params = [{transform_indices = @transform_0, window_bounds = array<i64: 1, 19, 19, 12>}, {pipeline_mode = #tpu.pipeline_mode<synchronous>, transform_indices = @transform_1, window_bounds = array<i64: 192, 8>}, {pipeline_mode = #tpu.pipeline_mode<synchronous>, transform_indices = @transform_2, window_bounds = array<i64: 1, 8>}, {pipeline_mode = #tpu.pipeline_mode<synchronous>, transform_indices = @transform_3, window_bounds = array<i64: 1, 8>}, {transform_indices = @transform_4, window_bounds = array<i64: 1, 16, 16, 8>}]} {
    %c0 = arith.constant 0 : index
    %c0_0 = arith.constant 0 : index
    %0 = vector.load %arg3[%c0, %c0_0] : memref<1x8xf32, #tpu.memory_space<vmem>>, vector<1x8xf32>
    %c0_1 = arith.constant 0 : index
    %c0_2 = arith.constant 0 : index
    %1 = vector.load %arg4[%c0_1, %c0_2] : memref<1x8xf32, #tpu.memory_space<vmem>>, vector<1x8xf32>
    %c0_i32 = arith.constant 0 : i32
    %c16_i32 = arith.constant 16 : i32
    %2 = arith.addi %c0_i32, %c16_i32 : i32
    %c1_i32 = arith.constant 1 : i32
    scf.for %arg6 = %c0_i32 to %2 step %c1_i32  : i32 {
      %cst = arith.constant 0.000000e+00 : f32
      %3 = vector.broadcast %cst : f32 to vector<16x8xf32>
      %c0_i32_4 = arith.constant 0 : i32
      %4 = arith.addi %arg6, %c0_i32_4 : i32
      %c0_5 = arith.constant 0 : index
      %5 = arith.index_cast %4 : i32 to index
      %c0_6 = arith.constant 0 : index
      %c0_7 = arith.constant 0 : index
      %6 = vector.load %arg1[%c0_5, %5, %c0_6, %c0_7] : memref<1x19x19x12xbf16, #tpu.memory_space<vmem>>, vector<1x1x16x12xbf16>
      %7 = vector.shape_cast %6 : vector<1x1x16x12xbf16> to vector<16x12xbf16>
      %c0_8 = arith.constant 0 : index
      %c0_9 = arith.constant 0 : index
      %8 = vector.load %arg2[%c0_8, %c0_9] : memref<192x8xbf16, #tpu.memory_space<vmem>>, vector<12x8xbf16>
      %cst_10 = arith.constant dense<0.000000e+00> : vector<16x8xf32>
      %9 = tpu.matmul %7, %8, %cst_10 {dimension_numbers = #tpu.dot_dimension_numbers<[1], [0], [0], [1], [0, 0, 1, 1], [], []>} : vector<16x12xbf16>, vector<12x8xbf16>, vector<16x8xf32> -> vector<16x8xf32>
      %10 = arith.addf %3, %9 : vector<16x8xf32>
      %c0_i32_11 = arith.constant 0 : i32
      %11 = arith.addi %arg6, %c0_i32_11 : i32
      %c0_12 = arith.constant 0 : index
      %12 = arith.index_cast %11 : i32 to index
      %c1 = arith.constant 1 : index
      %c0_13 = arith.constant 0 : index
      %13 = vector.load %arg1[%c0_12, %12, %c1, %c0_13] : memref<1x19x19x12xbf16, #tpu.memory_space<vmem>>, vector<1x1x16x12xbf16>
      %14 = vector.shape_cast %13 : vector<1x1x16x12xbf16> to vector<16x12xbf16>
      %c12 = arith.constant 12 : index
      %c0_14 = arith.constant 0 : index
      %15 = vector.load %arg2[%c12, %c0_14] : memref<192x8xbf16, #tpu.memory_space<vmem>>, vector<12x8xbf16>
      %cst_15 = arith.constant dense<0.000000e+00> : vector<16x8xf32>
      %16 = tpu.matmul %14, %15, %cst_15 {dimension_numbers = #tpu.dot_dimension_numbers<[1], [0], [0], [1], [0, 0, 1, 1], [], []>} : vector<16x12xbf16>, vector<12x8xbf16>, vector<16x8xf32> -> vector<16x8xf32>
      %17 = arith.addf %10, %16 : vector<16x8xf32>
      %c0_i32_16 = arith.constant 0 : i32
      %18 = arith.addi %arg6, %c0_i32_16 : i32
      %c0_17 = arith.constant 0 : index
      %19 = arith.index_cast %18 : i32 to index
      %c2 = arith.constant 2 : index
      %c0_18 = arith.constant 0 : index
      %20 = vector.load %arg1[%c0_17, %19, %c2, %c0_18] : memref<1x19x19x12xbf16, #tpu.memory_space<vmem>>, vector<1x1x16x12xbf16>
      %21 = vector.shape_cast %20 : vector<1x1x16x12xbf16> to vector<16x12xbf16>
      %c24 = arith.constant 24 : index
      %c0_19 = arith.constant 0 : index
      %22 = vector.load %arg2[%c24, %c0_19] : memref<192x8xbf16, #tpu.memory_space<vmem>>, vector<12x8xbf16>
      %cst_20 = arith.constant dense<0.000000e+00> : vector<16x8xf32>
      %23 = tpu.matmul %21, %22, %cst_20 {dimension_numbers = #tpu.dot_dimension_numbers<[1], [0], [0], [1], [0, 0, 1, 1], [], []>} : vector<16x12xbf16>, vector<12x8xbf16>, vector<16x8xf32> -> vector<16x8xf32>
      %24 = arith.addf %17, %23 : vector<16x8xf32>
      %c0_i32_21 = arith.constant 0 : i32
      %25 = arith.addi %arg6, %c0_i32_21 : i32
      %c0_22 = arith.constant 0 : index
      %26 = arith.index_cast %25 : i32 to index
      %c3 = arith.constant 3 : index
      %c0_23 = arith.constant 0 : index
      %27 = vector.load %arg1[%c0_22, %26, %c3, %c0_23] : memref<1x19x19x12xbf16, #tpu.memory_space<vmem>>, vector<1x1x16x12xbf16>
      %28 = vector.shape_cast %27 : vector<1x1x16x12xbf16> to vector<16x12xbf16>
      %c36 = arith.constant 36 : index
      %c0_24 = arith.constant 0 : index
      %29 = vector.load %arg2[%c36, %c0_24] : memref<192x8xbf16, #tpu.memory_space<vmem>>, vector<12x8xbf16>
      %cst_25 = arith.constant dense<0.000000e+00> : vector<16x8xf32>
      %30 = tpu.matmul %28, %29, %cst_25 {dimension_numbers = #tpu.dot_dimension_numbers<[1], [0], [0], [1], [0, 0, 1, 1], [], []>} : vector<16x12xbf16>, vector<12x8xbf16>, vector<16x8xf32> -> vector<16x8xf32>
      %31 = arith.addf %24, %30 : vector<16x8xf32>
      %c1_i32_26 = arith.constant 1 : i32
      %32 = arith.addi %arg6, %c1_i32_26 : i32
      %c0_27 = arith.constant 0 : index
      %33 = arith.index_cast %32 : i32 to index
      %c0_28 = arith.constant 0 : index
      %c0_29 = arith.constant 0 : index
      %34 = vector.load %arg1[%c0_27, %33, %c0_28, %c0_29] : memref<1x19x19x12xbf16, #tpu.memory_space<vmem>>, vector<1x1x16x12xbf16>
      %35 = vector.shape_cast %34 : vector<1x1x16x12xbf16> to vector<16x12xbf16>
      %c48 = arith.constant 48 : index
      %c0_30 = arith.constant 0 : index
      %36 = vector.load %arg2[%c48, %c0_30] : memref<192x8xbf16, #tpu.memory_space<vmem>>, vector<12x8xbf16>
      %cst_31 = arith.constant dense<0.000000e+00> : vector<16x8xf32>
      %37 = tpu.matmul %35, %36, %cst_31 {dimension_numbers = #tpu.dot_dimension_numbers<[1], [0], [0], [1], [0, 0, 1, 1], [], []>} : vector<16x12xbf16>, vector<12x8xbf16>, vector<16x8xf32> -> vector<16x8xf32>
      %38 = arith.addf %31, %37 : vector<16x8xf32>
      %c1_i32_32 = arith.constant 1 : i32
      %39 = arith.addi %arg6, %c1_i32_32 : i32
      %c0_33 = arith.constant 0 : index
      %40 = arith.index_cast %39 : i32 to index
      %c1_34 = arith.constant 1 : index
      %c0_35 = arith.constant 0 : index
      %41 = vector.load %arg1[%c0_33, %40, %c1_34, %c0_35] : memref<1x19x19x12xbf16, #tpu.memory_space<vmem>>, vector<1x1x16x12xbf16>
      %42 = vector.shape_cast %41 : vector<1x1x16x12xbf16> to vector<16x12xbf16>
      %c60 = arith.constant 60 : index
      %c0_36 = arith.constant 0 : index
      %43 = vector.load %arg2[%c60, %c0_36] : memref<192x8xbf16, #tpu.memory_space<vmem>>, vector<12x8xbf16>
      %cst_37 = arith.constant dense<0.000000e+00> : vector<16x8xf32>
      %44 = tpu.matmul %42, %43, %cst_37 {dimension_numbers = #tpu.dot_dimension_numbers<[1], [0], [0], [1], [0, 0, 1, 1], [], []>} : vector<16x12xbf16>, vector<12x8xbf16>, vector<16x8xf32> -> vector<16x8xf32>
      %45 = arith.addf %38, %44 : vector<16x8xf32>
      %c1_i32_38 = arith.constant 1 : i32
      %46 = arith.addi %arg6, %c1_i32_38 : i32
      %c0_39 = arith.constant 0 : index
      %47 = arith.index_cast %46 : i32 to index
      %c2_40 = arith.constant 2 : index
      %c0_41 = arith.constant 0 : index
      %48 = vector.load %arg1[%c0_39, %47, %c2_40, %c0_41] : memref<1x19x19x12xbf16, #tpu.memory_space<vmem>>, vector<1x1x16x12xbf16>
      %49 = vector.shape_cast %48 : vector<1x1x16x12xbf16> to vector<16x12xbf16>
      %c72 = arith.constant 72 : index
      %c0_42 = arith.constant 0 : index
      %50 = vector.load %arg2[%c72, %c0_42] : memref<192x8xbf16, #tpu.memory_space<vmem>>, vector<12x8xbf16>
      %cst_43 = arith.constant dense<0.000000e+00> : vector<16x8xf32>
      %51 = tpu.matmul %49, %50, %cst_43 {dimension_numbers = #tpu.dot_dimension_numbers<[1], [0], [0], [1], [0, 0, 1, 1], [], []>} : vector<16x12xbf16>, vector<12x8xbf16>, vector<16x8xf32> -> vector<16x8xf32>
      %52 = arith.addf %45, %51 : vector<16x8xf32>
      %c1_i32_44 = arith.constant 1 : i32
      %53 = arith.addi %arg6, %c1_i32_44 : i32
      %c0_45 = arith.constant 0 : index
      %54 = arith.index_cast %53 : i32 to index
      %c3_46 = arith.constant 3 : index
      %c0_47 = arith.constant 0 : index
      %55 = vector.load %arg1[%c0_45, %54, %c3_46, %c0_47] : memref<1x19x19x12xbf16, #tpu.memory_space<vmem>>, vector<1x1x16x12xbf16>
      %56 = vector.shape_cast %55 : vector<1x1x16x12xbf16> to vector<16x12xbf16>
      %c84 = arith.constant 84 : index
      %c0_48 = arith.constant 0 : index
      %57 = vector.load %arg2[%c84, %c0_48] : memref<192x8xbf16, #tpu.memory_space<vmem>>, vector<12x8xbf16>
      %cst_49 = arith.constant dense<0.000000e+00> : vector<16x8xf32>
      %58 = tpu.matmul %56, %57, %cst_49 {dimension_numbers = #tpu.dot_dimension_numbers<[1], [0], [0], [1], [0, 0, 1, 1], [], []>} : vector<16x12xbf16>, vector<12x8xbf16>, vector<16x8xf32> -> vector<16x8xf32>
      %59 = arith.addf %52, %58 : vector<16x8xf32>
      %c2_i32 = arith.constant 2 : i32
      %60 = arith.addi %arg6, %c2_i32 : i32
      %c0_50 = arith.constant 0 : index
      %61 = arith.index_cast %60 : i32 to index
      %c0_51 = arith.constant 0 : index
      %c0_52 = arith.constant 0 : index
      %62 = vector.load %arg1[%c0_50, %61, %c0_51, %c0_52] : memref<1x19x19x12xbf16, #tpu.memory_space<vmem>>, vector<1x1x16x12xbf16>
      %63 = vector.shape_cast %62 : vector<1x1x16x12xbf16> to vector<16x12xbf16>
      %c96 = arith.constant 96 : index
      %c0_53 = arith.constant 0 : index
      %64 = vector.load %arg2[%c96, %c0_53] : memref<192x8xbf16, #tpu.memory_space<vmem>>, vector<12x8xbf16>
      %cst_54 = arith.constant dense<0.000000e+00> : vector<16x8xf32>
      %65 = tpu.matmul %63, %64, %cst_54 {dimension_numbers = #tpu.dot_dimension_numbers<[1], [0], [0], [1], [0, 0, 1, 1], [], []>} : vector<16x12xbf16>, vector<12x8xbf16>, vector<16x8xf32> -> vector<16x8xf32>
      %66 = arith.addf %59, %65 : vector<16x8xf32>
      %c2_i32_55 = arith.constant 2 : i32
      %67 = arith.addi %arg6, %c2_i32_55 : i32
      %c0_56 = arith.constant 0 : index
      %68 = arith.index_cast %67 : i32 to index
      %c1_57 = arith.constant 1 : index
      %c0_58 = arith.constant 0 : index
      %69 = vector.load %arg1[%c0_56, %68, %c1_57, %c0_58] : memref<1x19x19x12xbf16, #tpu.memory_space<vmem>>, vector<1x1x16x12xbf16>
      %70 = vector.shape_cast %69 : vector<1x1x16x12xbf16> to vector<16x12xbf16>
      %c108 = arith.constant 108 : index
      %c0_59 = arith.constant 0 : index
      %71 = vector.load %arg2[%c108, %c0_59] : memref<192x8xbf16, #tpu.memory_space<vmem>>, vector<12x8xbf16>
      %cst_60 = arith.constant dense<0.000000e+00> : vector<16x8xf32>
      %72 = tpu.matmul %70, %71, %cst_60 {dimension_numbers = #tpu.dot_dimension_numbers<[1], [0], [0], [1], [0, 0, 1, 1], [], []>} : vector<16x12xbf16>, vector<12x8xbf16>, vector<16x8xf32> -> vector<16x8xf32>
      %73 = arith.addf %66, %72 : vector<16x8xf32>
      %c2_i32_61 = arith.constant 2 : i32
      %74 = arith.addi %arg6, %c2_i32_61 : i32
      %c0_62 = arith.constant 0 : index
      %75 = arith.index_cast %74 : i32 to index
      %c2_63 = arith.constant 2 : index
      %c0_64 = arith.constant 0 : index
      %76 = vector.load %arg1[%c0_62, %75, %c2_63, %c0_64] : memref<1x19x19x12xbf16, #tpu.memory_space<vmem>>, vector<1x1x16x12xbf16>
      %77 = vector.shape_cast %76 : vector<1x1x16x12xbf16> to vector<16x12xbf16>
      %c120 = arith.constant 120 : index
      %c0_65 = arith.constant 0 : index
      %78 = vector.load %arg2[%c120, %c0_65] : memref<192x8xbf16, #tpu.memory_space<vmem>>, vector<12x8xbf16>
      %cst_66 = arith.constant dense<0.000000e+00> : vector<16x8xf32>
      %79 = tpu.matmul %77, %78, %cst_66 {dimension_numbers = #tpu.dot_dimension_numbers<[1], [0], [0], [1], [0, 0, 1, 1], [], []>} : vector<16x12xbf16>, vector<12x8xbf16>, vector<16x8xf32> -> vector<16x8xf32>
      %80 = arith.addf %73, %79 : vector<16x8xf32>
      %c2_i32_67 = arith.constant 2 : i32
      %81 = arith.addi %arg6, %c2_i32_67 : i32
      %c0_68 = arith.constant 0 : index
      %82 = arith.index_cast %81 : i32 to index
      %c3_69 = arith.constant 3 : index
      %c0_70 = arith.constant 0 : index
      %83 = vector.load %arg1[%c0_68, %82, %c3_69, %c0_70] : memref<1x19x19x12xbf16, #tpu.memory_space<vmem>>, vector<1x1x16x12xbf16>
      %84 = vector.shape_cast %83 : vector<1x1x16x12xbf16> to vector<16x12xbf16>
      %c132 = arith.constant 132 : index
      %c0_71 = arith.constant 0 : index
      %85 = vector.load %arg2[%c132, %c0_71] : memref<192x8xbf16, #tpu.memory_space<vmem>>, vector<12x8xbf16>
      %cst_72 = arith.constant dense<0.000000e+00> : vector<16x8xf32>
      %86 = tpu.matmul %84, %85, %cst_72 {dimension_numbers = #tpu.dot_dimension_numbers<[1], [0], [0], [1], [0, 0, 1, 1], [], []>} : vector<16x12xbf16>, vector<12x8xbf16>, vector<16x8xf32> -> vector<16x8xf32>
      %87 = arith.addf %80, %86 : vector<16x8xf32>
      %c3_i32 = arith.constant 3 : i32
      %88 = arith.addi %arg6, %c3_i32 : i32
      %c0_73 = arith.constant 0 : index
      %89 = arith.index_cast %88 : i32 to index
      %c0_74 = arith.constant 0 : index
      %c0_75 = arith.constant 0 : index
      %90 = vector.load %arg1[%c0_73, %89, %c0_74, %c0_75] : memref<1x19x19x12xbf16, #tpu.memory_space<vmem>>, vector<1x1x16x12xbf16>
      %91 = vector.shape_cast %90 : vector<1x1x16x12xbf16> to vector<16x12xbf16>
      %c144 = arith.constant 144 : index
      %c0_76 = arith.constant 0 : index
      %92 = vector.load %arg2[%c144, %c0_76] : memref<192x8xbf16, #tpu.memory_space<vmem>>, vector<12x8xbf16>
      %cst_77 = arith.constant dense<0.000000e+00> : vector<16x8xf32>
      %93 = tpu.matmul %91, %92, %cst_77 {dimension_numbers = #tpu.dot_dimension_numbers<[1], [0], [0], [1], [0, 0, 1, 1], [], []>} : vector<16x12xbf16>, vector<12x8xbf16>, vector<16x8xf32> -> vector<16x8xf32>
      %94 = arith.addf %87, %93 : vector<16x8xf32>
      %c3_i32_78 = arith.constant 3 : i32
      %95 = arith.addi %arg6, %c3_i32_78 : i32
      %c0_79 = arith.constant 0 : index
      %96 = arith.index_cast %95 : i32 to index
      %c1_80 = arith.constant 1 : index
      %c0_81 = arith.constant 0 : index
      %97 = vector.load %arg1[%c0_79, %96, %c1_80, %c0_81] : memref<1x19x19x12xbf16, #tpu.memory_space<vmem>>, vector<1x1x16x12xbf16>
      %98 = vector.shape_cast %97 : vector<1x1x16x12xbf16> to vector<16x12xbf16>
      %c156 = arith.constant 156 : index
      %c0_82 = arith.constant 0 : index
      %99 = vector.load %arg2[%c156, %c0_82] : memref<192x8xbf16, #tpu.memory_space<vmem>>, vector<12x8xbf16>
      %cst_83 = arith.constant dense<0.000000e+00> : vector<16x8xf32>
      %100 = tpu.matmul %98, %99, %cst_83 {dimension_numbers = #tpu.dot_dimension_numbers<[1], [0], [0], [1], [0, 0, 1, 1], [], []>} : vector<16x12xbf16>, vector<12x8xbf16>, vector<16x8xf32> -> vector<16x8xf32>
      %101 = arith.addf %94, %100 : vector<16x8xf32>
      %c3_i32_84 = arith.constant 3 : i32
      %102 = arith.addi %arg6, %c3_i32_84 : i32
      %c0_85 = arith.constant 0 : index
      %103 = arith.index_cast %102 : i32 to index
      %c2_86 = arith.constant 2 : index
      %c0_87 = arith.constant 0 : index
      %104 = vector.load %arg1[%c0_85, %103, %c2_86, %c0_87] : memref<1x19x19x12xbf16, #tpu.memory_space<vmem>>, vector<1x1x16x12xbf16>
      %105 = vector.shape_cast %104 : vector<1x1x16x12xbf16> to vector<16x12xbf16>
      %c168 = arith.constant 168 : index
      %c0_88 = arith.constant 0 : index
      %106 = vector.load %arg2[%c168, %c0_88] : memref<192x8xbf16, #tpu.memory_space<vmem>>, vector<12x8xbf16>
      %cst_89 = arith.constant dense<0.000000e+00> : vector<16x8xf32>
      %107 = tpu.matmul %105, %106, %cst_89 {dimension_numbers = #tpu.dot_dimension_numbers<[1], [0], [0], [1], [0, 0, 1, 1], [], []>} : vector<16x12xbf16>, vector<12x8xbf16>, vector<16x8xf32> -> vector<16x8xf32>
      %108 = arith.addf %101, %107 : vector<16x8xf32>
      %c3_i32_90 = arith.constant 3 : i32
      %109 = arith.addi %arg6, %c3_i32_90 : i32
      %c0_91 = arith.constant 0 : index
      %110 = arith.index_cast %109 : i32 to index
      %c3_92 = arith.constant 3 : index
      %c0_93 = arith.constant 0 : index
      %111 = vector.load %arg1[%c0_91, %110, %c3_92, %c0_93] : memref<1x19x19x12xbf16, #tpu.memory_space<vmem>>, vector<1x1x16x12xbf16>
      %112 = vector.shape_cast %111 : vector<1x1x16x12xbf16> to vector<16x12xbf16>
      %c180 = arith.constant 180 : index
      %c0_94 = arith.constant 0 : index
      %113 = vector.load %arg2[%c180, %c0_94] : memref<192x8xbf16, #tpu.memory_space<vmem>>, vector<12x8xbf16>
      %cst_95 = arith.constant dense<0.000000e+00> : vector<16x8xf32>
      %114 = tpu.matmul %112, %113, %cst_95 {dimension_numbers = #tpu.dot_dimension_numbers<[1], [0], [0], [1], [0, 0, 1, 1], [], []>} : vector<16x12xbf16>, vector<12x8xbf16>, vector<16x8xf32> -> vector<16x8xf32>
      %115 = arith.addf %108, %114 : vector<16x8xf32>
      %116 = vector.broadcast %0 : vector<1x8xf32> to vector<16x8xf32>
      %117 = arith.mulf %115, %116 : vector<16x8xf32>
      %118 = vector.broadcast %1 : vector<1x8xf32> to vector<16x8xf32>
      %119 = arith.addf %117, %118 : vector<16x8xf32>
      %cst_96 = arith.constant 0.000000e+00 : f32
      %120 = vector.broadcast %cst_96 : f32 to vector<16x8xf32>
      %121 = arith.maximumf %119, %120 : vector<16x8xf32>
      %122 = arith.truncf %121 : vector<16x8xf32> to vector<16x8xbf16>
      %c0_97 = arith.constant 0 : index
      %123 = arith.index_cast %arg6 : i32 to index
      %c0_98 = arith.constant 0 : index
      %c0_99 = arith.constant 0 : index
      %124 = vector.load %arg5[%c0_97, %123, %c0_98, %c0_99] : memref<1x16x16x8xbf16, #tpu.memory_space<vmem>>, vector<1x1x16x8xbf16>
      %125 = vector.shape_cast %124 : vector<1x1x16x8xbf16> to vector<16x8xbf16>
      %126 = vector.shape_cast %122 : vector<16x8xbf16> to vector<1x1x16x8xbf16>
      tpu.vector_store %arg5[%c0_97, %123, %c0_98, %c0_99], %126 {strides = array<i32>} : memref<1x16x16x8xbf16, #tpu.memory_space<vmem>>, vector<1x1x16x8xbf16>,
    }
    %c16_i32_3 = arith.constant 16 : i32
    return
  }
  func.func @transform_0(%arg0: i32) -> (i32, i32, i32, i32) {
    %c0_i32 = arith.constant 0 : i32
    %c0_i32_0 = arith.constant 0 : i32
    %c0_i32_1 = arith.constant 0 : i32
    %c0_i32_2 = arith.constant 0 : i32
    return %arg0, %c0_i32, %c0_i32_0, %c0_i32_1 : i32, i32, i32, i32
  }
  func.func @transform_1(%arg0: i32) -> (i32, i32) {
    %c0_i32 = arith.constant 0 : i32
    %c0_i32_0 = arith.constant 0 : i32
    %c0_i32_1 = arith.constant 0 : i32
    return %c0_i32, %c0_i32_0 : i32, i32
  }
  func.func @transform_2(%arg0: i32) -> (i32, i32) {
    %c0_i32 = arith.constant 0 : i32
    %c0_i32_0 = arith.constant 0 : i32
    %c0_i32_1 = arith.constant 0 : i32
    return %c0_i32, %c0_i32_0 : i32, i32
  }
  func.func @transform_3(%arg0: i32) -> (i32, i32) {
    %c0_i32 = arith.constant 0 : i32
    %c0_i32_0 = arith.constant 0 : i32
    %c0_i32_1 = arith.constant 0 : i32
    return %c0_i32, %c0_i32_0 : i32, i32
  }
  func.func @transform_4(%arg0: i32) -> (i32, i32, i32, i32) {
    %c0_i32 = arith.constant 0 : i32
    %c0_i32_0 = arith.constant 0 : i32
    %c0_i32_1 = arith.constant 0 : i32
    %c0_i32_2 = arith.constant 0 : i32
    return %arg0, %c0_i32, %c0_i32_0, %c0_i32_1 : i32, i32, i32, i32
  }
}

</mosaic_0001>

<llo_original>
// kernel: tpu_custom_call.1
$region0: #{tpu_custom_call.1}
  #allocation0 [shape = 'u32[]', space=smem, size = 0x4, offset = 0x4, fixed_abs, tag = 'smem constant byte address 0x4 - core index']
  #allocation1 [shape = 'u32[144,128]{1,0:T(1,128)}', space=vmem, size = 0x12000, scoped, tag = 'internal scratch']
  %s0 = inlined_call_operand.vmem [shape: bf16[2,19,19,12], index: 0, kind: input, shape index: {}]
  %s1 = inlined_call_operand.vmem [shape: bf16[192,8], index: 1, kind: input, shape index: {}]
  %s2 = inlined_call_operand.vmem [shape: f32[1,8], index: 2, kind: input, shape index: {}]
  %s3 = inlined_call_operand.vmem [shape: f32[1,8], index: 3, kind: input, shape index: {}]
  %s4 = inlined_call_operand.vmem [shape: bf16[2,16,16,8], index: 4, kind: output, shape index: {}]
  %s5 = sld [smem:[#allocation0]]
  $region56: #{tpu_custom_call.1} parent=0
    _
  %s7 = ssub.s32 1, %s5
  %s8 = scalar_select 0, %s7, %s5
  loop: start=0, step=1, limit=4
  $region2: #{tpu_custom_call.1} parent=0 // loop_pre_header
    _
  $region3: #{tpu_custom_call.1} parent=0 // loop_header
    %s10 = sphi 0, %s14
    %p11 = scmp.ge.s32.totalorder %s10, 4
    %s20 = sphi 0, %s22
    %s23 = sphi 0, %s20
    %s24 = sphi 0, %s23
    %s40 = sphi 0, %s24
    %s44 = sphi 0, %s44
    %s46 = sphi 0, %s44
    %s47 = sphi 0, %s46
    %s61 = sphi 0, %s47
    %s65 = sphi 0, %s65
    %s67 = sphi 0, %s65
    %s68 = sphi 0, %s67
    %s82 = sphi 0, %s68
    %s86 = sphi 0, %s86
    %s88 = sphi 0, %s86
    %s89 = sphi 0, %s88
    %s103 = sphi 0, %s89
    %s109 = sphi 0, %s111
    %s112 = sphi 0, %s109
    %s113 = sphi 0, %s112
    %s129 = sphi 0, %s113
  $region4: #{tpu_custom_call.1} parent=0 // loop_header_branch
    %13 = sbr.rel (%p11) target = $region8
  $region5: #{tpu_custom_call.1} parent=0 // loop_body
    %s15 = ssub.s32 %s10, 1
    %s16 = ssub.s32 %s10, 2
    %s17 = sadd.s32 %s10, 1
    %s18 = ssub.s32 %s10, %s17
    %p19 = scmp.eq.s32.totalorder %s18, 0
    %s21 = sadd.s32 %s20, 1
    %s22 = scalar_select %p19, %s20, %s21
    %p25 = pneg %p19
    %p26 = scmp.eq.s32.totalorder %s10, 1
    %p27 = por %p25, %p26
    %p28 = scmp.ne.s32.totalorder %s20, %s23
    %p29 = scmp.eq.s32.totalorder %s10, 0
    %p30 = por %p28, %p29
    %p31 = scmp.ne.s32.totalorder %s20, %s23
    %p32 = scmp.eq.s32.totalorder %s15, 1
    %p33 = por %p31, %p32
    %p34 = scmp.ne.s32.totalorder %s23, %s24
    %p35 = scmp.eq.s32.totalorder %s15, 0
    %p36 = por %p34, %p35
    %p37 = scmp.ne.s32.totalorder %s23, %s24
    %p38 = scmp.eq.s32.totalorder %s16, 1
    %p39 = por %p37, %p38
    %p41 = scmp.ne.s32.totalorder %s24, %s40
    %p42 = scmp.eq.s32.totalorder %s16, 0
    %p43 = por %p41, %p42
    %s45 = sadd.s32 %s44, 1
    %p48 = scmp.eq.s32.totalorder %s10, 1
    %p49 = scmp.ne.s32.totalorder %s44, %s46
    %p50 = scmp.eq.s32.totalorder %s10, 0
    %p51 = por %p49, %p50
    %p52 = scmp.ne.s32.totalorder %s44, %s46
    %p53 = scmp.eq.s32.totalorder %s15, 1
    %p54 = por %p52, %p53
    %p55 = scmp.ne.s32.totalorder %s46, %s47
    %p56 = scmp.eq.s32.totalorder %s15, 0
    %p57 = por %p55, %p56
    %p58 = scmp.ne.s32.totalorder %s46, %s47
    %p59 = scmp.eq.s32.totalorder %s16, 1
    %p60 = por %p58, %p59
    %p62 = scmp.ne.s32.totalorder %s47, %s61
    %p63 = scmp.eq.s32.totalorder %s16, 0
    %p64 = por %p62, %p63
    %s66 = sadd.s32 %s65, 1
    %p69 = scmp.eq.s32.totalorder %s10, 1
    %p70 = scmp.ne.s32.totalorder %s65, %s67
    %p71 = scmp.eq.s32.totalorder %s10, 0
    %p72 = por %p70, %p71
    %p73 = scmp.ne.s32.totalorder %s65, %s67
    %p74 = scmp.eq.s32.totalorder %s15, 1
    %p75 = por %p73, %p74
    %p76 = scmp.ne.s32.totalorder %s67, %s68
    %p77 = scmp.eq.s32.totalorder %s15, 0
    %p78 = por %p76, %p77
    %p79 = scmp.ne.s32.totalorder %s67, %s68
    %p80 = scmp.eq.s32.totalorder %s16, 1
    %p81 = por %p79, %p80
    %p83 = scmp.ne.s32.totalorder %s68, %s82
    %p84 = scmp.eq.s32.totalorder %s16, 0
    %p85 = por %p83, %p84
    %s87 = sadd.s32 %s86, 1
    %p90 = scmp.eq.s32.totalorder %s10, 1
    %p91 = scmp.ne.s32.totalorder %s86, %s88
    %p92 = scmp.eq.s32.totalorder %s10, 0
    %p93 = por %p91, %p92
    %p94 = scmp.ne.s32.totalorder %s86, %s88
    %p95 = scmp.eq.s32.totalorder %s15, 1
    %p96 = por %p94, %p95
    %p97 = scmp.ne.s32.totalorder %s88, %s89
    %p98 = scmp.eq.s32.totalorder %s15, 0
    %p99 = por %p97, %p98
    %p100 = scmp.ne.s32.totalorder %s88, %s89
    %p101 = scmp.eq.s32.totalorder %s16, 1
    %p102 = por %p100, %p101
    %p104 = scmp.ne.s32.totalorder %s89, %s103
    %p105 = scmp.eq.s32.totalorder %s16, 0
    %p106 = por %p104, %p105
    %s107 = ssub.s32 %s10, %s17
    %p108 = scmp.eq.s32.totalorder %s107, 0
    %s110 = sadd.s32 %s109, 1
    %s111 = scalar_select %p108, %s109, %s110
    %p114 = pneg %p108
    %p115 = scmp.eq.s32.totalorder %s10, 1
    %p116 = por %p114, %p115
    %p117 = scmp.ne.s32.totalorder %s109, %s112
    %p118 = scmp.eq.s32.totalorder %s10, 0
    %p119 = por %p117, %p118
    %p120 = scmp.ne.s32.totalorder %s109, %s112
    %p121 = scmp.eq.s32.totalorder %s15, 1
    %p122 = por %p120, %p121
    %p123 = scmp.ne.s32.totalorder %s112, %s113
    %p124 = scmp.eq.s32.totalorder %s15, 0
    %p125 = por %p123, %p124
    %p126 = scmp.ne.s32.totalorder %s112, %s113
    %p127 = scmp.eq.s32.totalorder %s16, 1
    %p128 = por %p126, %p127
    %p130 = scmp.ne.s32.totalorder %s113, %s129
    %p131 = scmp.eq.s32.totalorder %s16, 0
    %p132 = por %p130, %p131
    %p133 = scmp.le.s32.totalorder 1, %s10
    %p134 = scmp.lt.s32.totalorder %s10, 3
    %p135 = pnand %p133, %p134
    %p136 = pneg %p135
    // Predicated region
    $region9: #{tpu_custom_call.1} parent=5 // pred_check
      _
    $region10: #{tpu_custom_call.1} parent=5 // pred_check_branch
      %138 = sbr.rel (%p135) target = $region12
    $region11: #{tpu_custom_call.1} parent=5 // pred_region
      %s139 = ssub.s32 %s10, 1
      // Predicated region
      $region13: #{tpu_custom_call.1} parent=11 // pred_check
        %p140 = pneg %p57
      $region14: #{tpu_custom_call.1} parent=11 // pred_check_branch
        %142 = sbr.rel (%p140) target = $region16
      $region15: #{tpu_custom_call.1} parent=11 // pred_region
        _
      $region16: #{tpu_custom_call.1} parent=11 // pred_fallthru
        _
      // Predicated region
      $region17: #{tpu_custom_call.1} parent=11 // pred_check
        %p143 = pneg %p78
      $region18: #{tpu_custom_call.1} parent=11 // pred_check_branch
        %145 = sbr.rel (%p143) target = $region20
      $region19: #{tpu_custom_call.1} parent=11 // pred_region
        _
      $region20: #{tpu_custom_call.1} parent=11 // pred_fallthru
        _
      // Predicated region
      $region21: #{tpu_custom_call.1} parent=11 // pred_check
        %p146 = pneg %p99
      $region22: #{tpu_custom_call.1} parent=11 // pred_check_branch
        %148 = sbr.rel (%p146) target = $region24
      $region23: #{tpu_custom_call.1} parent=11 // pred_region
        _
      $region24: #{tpu_custom_call.1} parent=11 // pred_fallthru
        _
    $region12: #{tpu_custom_call.1} parent=5 // pred_fallthru
      _
    %p149 = scmp.lt.s32.totalorder %s10, 2
    // Predicated region
    $region25: #{tpu_custom_call.1} parent=5 // pred_check
      %p150 = pneg %p149
    $region26: #{tpu_custom_call.1} parent=5 // pred_check_branch
      %152 = sbr.rel (%p150) target = $region28
    $region27: #{tpu_custom_call.1} parent=5 // pred_region
      // Predicated region
      $region29: #{tpu_custom_call.1} parent=27 // pred_check
        %p153 = pneg %p30
      $region30: #{tpu_custom_call.1} parent=27 // pred_check_branch
        %155 = sbr.rel (%p153) target = $region32
      $region31: #{tpu_custom_call.1} parent=27 // pred_region
        %p156 = scmp.lt.s32.totalorder %s10, 1
        %s157 = scalar_select %p156, %s10, 1
        %s158 = smul.addr %s157, 57
        %s159 = smul.addr %s158, 4
        %s160 = scalar_lea.vmem %s0, %s159
      $region32: #{tpu_custom_call.1} parent=27 // pred_fallthru
        _
    $region28: #{tpu_custom_call.1} parent=5 // pred_fallthru
      _
    %p161 = scmp.le.s32.totalorder 1, %s10
    %p162 = scmp.lt.s32.totalorder %s10, 3
    %p163 = pnand %p161, %p162
    %p164 = pneg %p163
    // Predicated region
    $region33: #{tpu_custom_call.1} parent=5 // pred_check
      _
    $region34: #{tpu_custom_call.1} parent=5 // pred_check_branch
      %166 = sbr.rel (%p163) target = $region36
    $region35: #{tpu_custom_call.1} parent=5 // pred_region
      %s167 = ssub.s32 %s10, 1
      %p168 = scmp.lt.s32.totalorder %s15, 1
      %s169 = scalar_select %p168, %s15, 1
      %s170 = smul.addr %s169, 57
      %s171 = smul.addr %s170, 4
      %s172 = scalar_lea.vmem %s0, %s171
      %p173 = pneg %p36
      %p174 = pneg %p33
      %p175 = pneg %p57
      %p176 = pneg %p54
      %p177 = pneg %p78
      %p178 = pneg %p75
      %p179 = pneg %p99
      %p180 = pneg %p96
      %p181 = pneg %p125
      %p182 = pneg %p122
      %p183 = scmp.lt.s32.totalorder %s15, 1
      %s184 = scalar_select %p183, %s15, 1
      %s185 = smul.addr %s184, 32
      %s186 = smul.addr %s185, 4
      %s187 = scalar_lea.vmem %s4, %s186
      %p188 = scmp.lt.s32.totalorder %s15, 1
      %s189 = scalar_select %p188, %s15, 1
      %s190 = smul.addr %s189, 57
      %s191 = smul.addr %s190, 4
      %s192 = scalar_lea.vmem %s0, %s191
      %p193 = scmp.lt.s32.totalorder %s15, 1
      %s194 = scalar_select %p193, %s15, 1
      %s195 = smul.addr %s194, 32
      %s196 = smul.addr %s195, 4
      %s197 = scalar_lea.vmem %s4, %s196
      %v199 = vld [vmem:[%s2] sm:$0x1]
      %v200 = vld [vmem:[%s3] sm:$0x1]
      loop: start=0, step=1, limit=16
      $region37: #{tpu_custom_call.1} parent=35 // loop_pre_header
        _
      $region38: #{tpu_custom_call.1} parent=35 // loop_header
        %s202 = sphi 0, %s206
        %p203 = scmp.ge.s32.totalorder %s202, 16
      $region39: #{tpu_custom_call.1} parent=35 // loop_header_branch
        %205 = sbr.rel (%p203) target = $region43
      $region40: #{tpu_custom_call.1} parent=35 // loop_body
        %s207 = smul.u32 %s202, 3
        %s208 = smul.addr %s207, 4
        %s209 = scalar_lea.vmem %s192, %s208
        %v210 = vld [vmem:[%s209] sm:$0xf]
        %v211 = vld [vmem:[%s209 + $0x4] sm:$0xf]
        %v212 = vld [vmem:[%s1] sm:$0xf]
        %v213 = vld [vmem:[%s1 + $0x4] sm:$0x3]
        %v214 = vld [vmem:[%s209 + $0x8] sm:$0x1]
        %v215 = vld [vmem:[%s1 + $0x4] sm:$0xc]
        %v216 = vld [vmem:[%s1 + $0x8] sm:$0xf]
        %v220 = vunpack.c.l.b16 %v210
        %v221 = vunpack.c.l.b16 %v211
        %v222 = vunpack.c.l.b16 %v214
        %v223 = vpack.c.b16 %v221, %v220
        %v224 = vpack.c.b16 %v222, %v222
        %vm225 = vsmask.f32 7424
        %v227 = vshrl.u32 %v223, 16
        %v229 = vshll.u32 %v223, 16
        %v231 = vrot.slane %v229, 1
        %v232 = vor.u32 %v227, %v231
        %v234 = vshll.u32 %v224, 16
        %v236 = vrot.slane %v234, 1
        %v237 = vsel %vm225, %v232, %v236
        %v240 = vunpack.c.l.b16 %v215
        %v241 = vunpack.c.l.b16 %v216
        %v242 = vpack.c.b16 %v241, %v240
        %v243 = vrot.slane %v242, 2
        %vm244 = vcmask 97280
        %v246 = vsel %vm244, %v237, 0
        %vm248 = vcmask 1045504
        %v250 = vsel %vm248, %v243, 0
        %252 = vmatprep.subr.bf16.mxu0 0
        %253 = vmatpush1.bf16.msra.mxu0 %v250
        %254 = vmatprep.subr.bf16.mxu0 0
        %255 = vmatpush1.bf16.msra.mxu0 0
        %256 = vmatprep.subr.bf16.mxu0 0
        %257 = vmatpush1.bf16.msra.mxu0 0
        %258 = vmatprep.subr.bf16.mxu0 0
        %259 = vmatpush1.bf16.msra.mxu0 0
        %260 = vmatprep.subr.bf16.mxu0 0
        %261 = vmatpush1.bf16.msra.mxu0 0
        %262 = vmatprep.subr.bf16.mxu0 0
        %263 = vmatpush1.bf16.msra.mxu0 0
        %264 = vmatprep.subr.bf16.mxu0 0
        %265 = vmatpush1.bf16.msra.mxu0 0
        %266 = vmatprep.subr.bf16.mxu0 0
        %267 = vmatpush1.bf16.msra.mxu0 0
        %268 = vmatprep.subr.bf16.mxu0 0
        %269 = vmatpush1.bf16.msra.mxu0 0
        %270 = vmatprep.subr.bf16.mxu0 0
        %271 = vmatpush1.bf16.msra.mxu0 0
        %272 = vmatprep.subr.bf16.mxu0 0
        %273 = vmatpush1.bf16.msra.mxu0 0
        %274 = vmatprep.subr.bf16.mxu0 0
        %275 = vmatpush1.bf16.msra.mxu0 0
        %276 = vmatprep.subr.bf16.mxu0 0
        %277 = vmatpush1.bf16.msra.mxu0 0
        %278 = vmatprep.subr.bf16.mxu0 0
        %279 = vmatpush1.bf16.msra.mxu0 0
        %280 = vmatprep.subr.bf16.mxu0 0
        %281 = vmatpush1.bf16.msra.mxu0 0
        %282 = vmatprep.subr.bf16.mxu0 0
        %283 = vmatpush1.bf16.msra.mxu0 0
        %284 = vmatprep.mubr.bf16.mxu0 0
        %285 = vmatmul.mubr.bf16.gmra.mrb[0].mxu0 %v246
        %v286 = vpop.f32.mrb[0].mxu0
        %v287 = vadd.f32 0.0, %v286
        %v288 = vpop.f32.mrb[0].mxu0
        %v289 = vpop.f32.mrb[0].mxu0
        %v290 = vadd.f32 0.0, %v289
        %v291 = vpop.f32.mrb[0].mxu0
        %292 = vdwg.mxu0
        %v295 = vunpack.c.l.b16 %v212
        %v296 = vunpack.c.l.b16 %v213
        %v297 = vpack.c.b16 %v296, %v295
        %v298 = vsel %vm244, %v223, 0
        %v301 = vsel %vm248, %v297, 0
        %303 = vmatprep.subr.bf16.mxu0 0
        %304 = vmatpush1.bf16.msra.mxu0 %v301
        %305 = vmatprep.subr.bf16.mxu0 0
        %306 = vmatpush1.bf16.msra.mxu0 0
        %307 = vmatprep.subr.bf16.mxu0 0
        %308 = vmatpush1.bf16.msra.mxu0 0
        %309 = vmatprep.subr.bf16.mxu0 0
        %310 = vmatpush1.bf16.msra.mxu0 0
        %311 = vmatprep.subr.bf16.mxu0 0
        %312 = vmatpush1.bf16.msra.mxu0 0
        %313 = vmatprep.subr.bf16.mxu0 0
        %314 = vmatpush1.bf16.msra.mxu0 0
        %315 = vmatprep.subr.bf16.mxu0 0
        %316 = vmatpush1.bf16.msra.mxu0 0
        %317 = vmatprep.subr.bf16.mxu0 0
        %318 = vmatpush1.bf16.msra.mxu0 0
        %319 = vmatprep.subr.bf16.mxu0 0
        %320 = vmatpush1.bf16.msra.mxu0 0
        %321 = vmatprep.subr.bf16.mxu0 0
        %322 = vmatpush1.bf16.msra.mxu0 0
        %323 = vmatprep.subr.bf16.mxu0 0
        %324 = vmatpush1.bf16.msra.mxu0 0
        %325 = vmatprep.subr.bf16.mxu0 0
        %326 = vmatpush1.bf16.msra.mxu0 0
        %327 = vmatprep.subr.bf16.mxu0 0
        %328 = vmatpush1.bf16.msra.mxu0 0
        %329 = vmatprep.subr.bf16.mxu0 0
        %330 = vmatpush1.bf16.msra.mxu0 0
        %331 = vmatprep.subr.bf16.mxu0 0
        %332 = vmatpush1.bf16.msra.mxu0 0
        %333 = vmatprep.subr.bf16.mxu0 0
        %334 = vmatpush1.bf16.msra.mxu0 0
        %335 = vmatprep.mubr.bf16.mxu0 0
        %336 = vmatmul.mubr.bf16.gmra.mrb[0].mxu0 %v298
        %v337 = vpop.f32.mrb[0].mxu0
        %v338 = vadd.f32 %v287, %v337
        %v339 = vpop.f32.mrb[0].mxu0
        %v340 = vpop.f32.mrb[0].mxu0
        %v341 = vadd.f32 %v290, %v340
        %v342 = vpop.f32.mrb[0].mxu0
        %343 = vdwg.mxu0
        %v344 = vld [vmem:[%s209] sm:$0xe]
        %v345 = vld [vmem:[%s1 + $0xc] sm:$0xf]
        %v346 = vld [vmem:[%s1 + $0x10] sm:$0x3]
        %v348 = vunpack.c.l.b16 %v344
        %v349 = vpack.c.b16 %v221, %v348
        %vm350 = vcmask 1046528
        %v351 = vrot.slane %v349, 1
        %v352 = vrot.slane %v224, 1
        %v353 = vsel %vm350, %v351, %v352
        %v356 = vunpack.c.l.b16 %v345
        %v357 = vunpack.c.l.b16 %v346
        %v358 = vpack.c.b16 %v357, %v356
        %v360 = vsel %vm244, %v353, 0
        %v363 = vsel %vm248, %v358, 0
        %365 = vmatprep.subr.bf16.mxu0 0
        %366 = vmatpush1.bf16.msra.mxu0 %v363
        %367 = vmatprep.subr.bf16.mxu0 0
        %368 = vmatpush1.bf16.msra.mxu0 0
        %369 = vmatprep.subr.bf16.mxu0 0
        %370 = vmatpush1.bf16.msra.mxu0 0
        %371 = vmatprep.subr.bf16.mxu0 0
        %372 = vmatpush1.bf16.msra.mxu0 0
        %373 = vmatprep.subr.bf16.mxu0 0
        %374 = vmatpush1.bf16.msra.mxu0 0
        %375 = vmatprep.subr.bf16.mxu0 0
        %376 = vmatpush1.bf16.msra.mxu0 0
        %377 = vmatprep.subr.bf16.mxu0 0
        %378 = vmatpush1.bf16.msra.mxu0 0
        %379 = vmatprep.subr.bf16.mxu0 0
        %380 = vmatpush1.bf16.msra.mxu0 0
        %381 = vmatprep.subr.bf16.mxu0 0
        %382 = vmatpush1.bf16.msra.mxu0 0
        %383 = vmatprep.subr.bf16.mxu0 0
        %384 = vmatpush1.bf16.msra.mxu0 0
        %385 = vmatprep.subr.bf16.mxu0 0
        %386 = vmatpush1.bf16.msra.mxu0 0
        %387 = vmatprep.subr.bf16.mxu0 0
        %388 = vmatpush1.bf16.msra.mxu0 0
        %389 = vmatprep.subr.bf16.mxu0 0
        %390 = vmatpush1.bf16.msra.mxu0 0
        %391 = vmatprep.subr.bf16.mxu0 0
        %392 = vmatpush1.bf16.msra.mxu0 0
        %393 = vmatprep.subr.bf16.mxu0 0
        %394 = vmatpush1.bf16.msra.mxu0 0
        %395 = vmatprep.subr.bf16.mxu0 0
        %396 = vmatpush1.bf16.msra.mxu0 0
        %397 = vmatprep.mubr.bf16.mxu0 0
        %398 = vmatmul.mubr.bf16.gmra.mrb[0].mxu0 %v360
        %v399 = vpop.f32.mrb[0].mxu0
        %v400 = vadd.f32 0.0, %v399
        %v401 = vpop.f32.mrb[0].mxu0
        %v402 = vpop.f32.mrb[0].mxu0
        %v403 = vadd.f32 0.0, %v402
        %v404 = vpop.f32.mrb[0].mxu0
        %405 = vdwg.mxu0
        %v406 = vadd.f32 %v338, %v400
        %v407 = vadd.f32 %v341, %v403
        %v408 = vld [vmem:[%s209 + $0x8] sm:$0x3]
        %v409 = vld [vmem:[%s1 + $0x10] sm:$0xc]
        %v410 = vld [vmem:[%s1 + $0x14] sm:$0xf]
        %v412 = vunpack.c.l.b16 %v408
        %v413 = vpack.c.b16 %v412, %v412
        %vm414 = vsmask.f32 6400
        %v416 = vshrl.u32 %v349, 16
        %v418 = vrot.slane %v416, 1
        %v419 = vshll.u32 %v349, 16
        %v421 = vrot.slane %v419, 2
        %v422 = vor.u32 %v418, %v421
        %v424 = vshrl.u32 %v413, 16
        %v426 = vrot.slane %v424, 1
        %v427 = vshll.u32 %v413, 16
        %v429 = vrot.slane %v427, 2
        %v430 = vor.u32 %v426, %v429
        %v431 = vsel %vm414, %v422, %v430
        %v434 = vunpack.c.l.b16 %v409
        %v435 = vunpack.c.l.b16 %v410
        %v436 = vpack.c.b16 %v435, %v434
        %v437 = vrot.slane %v436, 2
        %v439 = vsel %vm244, %v431, 0
        %v442 = vsel %vm248, %v437, 0
        %444 = vmatprep.subr.bf16.mxu0 0
        %445 = vmatpush1.bf16.msra.mxu0 %v442
        %446 = vmatprep.subr.bf16.mxu0 0
        %447 = vmatpush1.bf16.msra.mxu0 0
        %448 = vmatprep.subr.bf16.mxu0 0
        %449 = vmatpush1.bf16.msra.mxu0 0
        %450 = vmatprep.subr.bf16.mxu0 0
        %451 = vmatpush1.bf16.msra.mxu0 0
        %452 = vmatprep.subr.bf16.mxu0 0
        %453 = vmatpush1.bf16.msra.mxu0 0
        %454 = vmatprep.subr.bf16.mxu0 0
        %455 = vmatpush1.bf16.msra.mxu0 0
        %456 = vmatprep.subr.bf16.mxu0 0
        %457 = vmatpush1.bf16.msra.mxu0 0
        %458 = vmatprep.subr.bf16.mxu0 0
        %459 = vmatpush1.bf16.msra.mxu0 0
        %460 = vmatprep.subr.bf16.mxu0 0
        %461 = vmatpush1.bf16.msra.mxu0 0
        %462 = vmatprep.subr.bf16.mxu0 0
        %463 = vmatpush1.bf16.msra.mxu0 0
        %464 = vmatprep.subr.bf16.mxu0 0
        %465 = vmatpush1.bf16.msra.mxu0 0
        %466 = vmatprep.subr.bf16.mxu0 0
        %467 = vmatpush1.bf16.msra.mxu0 0
        %468 = vmatprep.subr.bf16.mxu0 0
        %469 = vmatpush1.bf16.msra.mxu0 0
        %470 = vmatprep.subr.bf16.mxu0 0
        %471 = vmatpush1.bf16.msra.mxu0 0
        %472 = vmatprep.subr.bf16.mxu0 0
        %473 = vmatpush1.bf16.msra.mxu0 0
        %474 = vmatprep.subr.bf16.mxu0 0
        %475 = vmatpush1.bf16.msra.mxu0 0
        %476 = vmatprep.mubr.bf16.mxu0 0
        %477 = vmatmul.mubr.bf16.gmra.mrb[0].mxu0 %v439
        %v478 = vpop.f32.mrb[0].mxu0
        %v479 = vadd.f32 0.0, %v478
        %v480 = vpop.f32.mrb[0].mxu0
        %v481 = vpop.f32.mrb[0].mxu0
        %v482 = vadd.f32 0.0, %v481
        %v483 = vpop.f32.mrb[0].mxu0
        %484 = vdwg.mxu0
        %v485 = vadd.f32 %v406, %v479
        %v486 = vadd.f32 %v407, %v482
        %s487 = sadd.s32 %s202, 1
        %s488 = smul.u32 %s487, 3
        %s489 = smul.addr %s488, 4
        %s490 = scalar_lea.vmem %s192, %s489
        %v491 = vld [vmem:[%s490] sm:$0xf]
        %v492 = vld [vmem:[%s490 + $0x4] sm:$0xf]
        %v493 = vld [vmem:[%s1 + $0x18] sm:$0xf]
        %v494 = vld [vmem:[%s1 + $0x1c] sm:$0x3]
        %v497 = vunpack.c.l.b16 %v491
        %v498 = vunpack.c.l.b16 %v492
        %v499 = vpack.c.b16 %v498, %v497
        %v502 = vunpack.c.l.b16 %v493
        %v503 = vunpack.c.l.b16 %v494
        %v504 = vpack.c.b16 %v503, %v502
        %v506 = vsel %vm244, %v499, 0
        %v509 = vsel %vm248, %v504, 0
        %511 = vmatprep.subr.bf16.mxu0 0
        %512 = vmatpush1.bf16.msra.mxu0 %v509
        %513 = vmatprep.subr.bf16.mxu0 0
        %514 = vmatpush1.bf16.msra.mxu0 0
        %515 = vmatprep.subr.bf16.mxu0 0
        %516 = vmatpush1.bf16.msra.mxu0 0
        %517 = vmatprep.subr.bf16.mxu0 0
        %518 = vmatpush1.bf16.msra.mxu0 0
        %519 = vmatprep.subr.bf16.mxu0 0
        %520 = vmatpush1.bf16.msra.mxu0 0
        %521 = vmatprep.subr.bf16.mxu0 0
        %522 = vmatpush1.bf16.msra.mxu0 0
        %523 = vmatprep.subr.bf16.mxu0 0
        %524 = vmatpush1.bf16.msra.mxu0 0
        %525 = vmatprep.subr.bf16.mxu0 0
        %526 = vmatpush1.bf16.msra.mxu0 0
        %527 = vmatprep.subr.bf16.mxu0 0
        %528 = vmatpush1.bf16.msra.mxu0 0
        %529 = vmatprep.subr.bf16.mxu0 0
        %530 = vmatpush1.bf16.msra.mxu0 0
        %531 = vmatprep.subr.bf16.mxu0 0
        %532 = vmatpush1.bf16.msra.mxu0 0
        %533 = vmatprep.subr.bf16.mxu0 0
        %534 = vmatpush1.bf16.msra.mxu0 0
        %535 = vmatprep.subr.bf16.mxu0 0
        %536 = vmatpush1.bf16.msra.mxu0 0
        %537 = vmatprep.subr.bf16.mxu0 0
        %538 = vmatpush1.bf16.msra.mxu0 0
        %539 = vmatprep.subr.bf16.mxu0 0
        %540 = vmatpush1.bf16.msra.mxu0 0
        %541 = vmatprep.subr.bf16.mxu0 0
        %542 = vmatpush1.bf16.msra.mxu0 0
        %543 = vmatprep.mubr.bf16.mxu0 0
        %544 = vmatmul.mubr.bf16.gmra.mrb[0].mxu0 %v506
        %v545 = vpop.f32.mrb[0].mxu0
        %v546 = vadd.f32 0.0, %v545
        %v547 = vpop.f32.mrb[0].mxu0
        %v548 = vpop.f32.mrb[0].mxu0
        %v549 = vadd.f32 0.0, %v548
        %v550 = vpop.f32.mrb[0].mxu0
        %551 = vdwg.mxu0
        %v552 = vadd.f32 %v485, %v546
        %v553 = vadd.f32 %v486, %v549
        %v554 = vld [vmem:[%s490] sm:$0xf]
        %v555 = vld [vmem:[%s490 + $0x4] sm:$0xf]
        %v556 = vld [vmem:[%s490 + $0x8] sm:$0x1]
        %v557 = vld [vmem:[%s1 + $0x1c] sm:$0xc]
        %v558 = vld [vmem:[%s1 + $0x20] sm:$0xf]
        %v562 = vunpack.c.l.b16 %v554
        %v563 = vunpack.c.l.b16 %v555
        %v564 = vunpack.c.l.b16 %v556
        %v565 = vpack.c.b16 %v563, %v562
        %v566 = vpack.c.b16 %v564, %v564
        %v568 = vshrl.u32 %v565, 16
        %v570 = vshll.u32 %v565, 16
        %v572 = vrot.slane %v570, 1
        %v573 = vor.u32 %v568, %v572
        %v575 = vshll.u32 %v566, 16
        %v577 = vrot.slane %v575, 1
        %v578 = vsel %vm225, %v573, %v577
        %v581 = vunpack.c.l.b16 %v557
        %v582 = vunpack.c.l.b16 %v558
        %v583 = vpack.c.b16 %v582, %v581
        %v584 = vrot.slane %v583, 2
        %v586 = vsel %vm244, %v578, 0
        %v589 = vsel %vm248, %v584, 0
        %591 = vmatprep.subr.bf16.mxu0 0
        %592 = vmatpush1.bf16.msra.mxu0 %v589
        %593 = vmatprep.subr.bf16.mxu0 0
        %594 = vmatpush1.bf16.msra.mxu0 0
        %595 = vmatprep.subr.bf16.mxu0 0
        %596 = vmatpush1.bf16.msra.mxu0 0
        %597 = vmatprep.subr.bf16.mxu0 0
        %598 = vmatpush1.bf16.msra.mxu0 0
        %599 = vmatprep.subr.bf16.mxu0 0
        %600 = vmatpush1.bf16.msra.mxu0 0
        %601 = vmatprep.subr.bf16.mxu0 0
        %602 = vmatpush1.bf16.msra.mxu0 0
        %603 = vmatprep.subr.bf16.mxu0 0
        %604 = vmatpush1.bf16.msra.mxu0 0
        %605 = vmatprep.subr.bf16.mxu0 0
        %606 = vmatpush1.bf16.msra.mxu0 0
        %607 = vmatprep.subr.bf16.mxu0 0
        %608 = vmatpush1.bf16.msra.mxu0 0
        %609 = vmatprep.subr.bf16.mxu0 0
        %610 = vmatpush1.bf16.msra.mxu0 0
        %611 = vmatprep.subr.bf16.mxu0 0
        %612 = vmatpush1.bf16.msra.mxu0 0
        %613 = vmatprep.subr.bf16.mxu0 0
        %614 = vmatpush1.bf16.msra.mxu0 0
        %615 = vmatprep.subr.bf16.mxu0 0
        %616 = vmatpush1.bf16.msra.mxu0 0
        %617 = vmatprep.subr.bf16.mxu0 0
        %618 = vmatpush1.bf16.msra.mxu0 0
        %619 = vmatprep.subr.bf16.mxu0 0
        %620 = vmatpush1.bf16.msra.mxu0 0
        %621 = vmatprep.subr.bf16.mxu0 0
        %622 = vmatpush1.bf16.msra.mxu0 0
        %623 = vmatprep.mubr.bf16.mxu0 0
        %624 = vmatmul.mubr.bf16.gmra.mrb[0].mxu0 %v586
        %v625 = vpop.f32.mrb[0].mxu0
        %v626 = vadd.f32 0.0, %v625
        %v627 = vpop.f32.mrb[0].mxu0
        %v628 = vpop.f32.mrb[0].mxu0
        %v629 = vadd.f32 0.0, %v628
        %v630 = vpop.f32.mrb[0].mxu0
        %631 = vdwg.mxu0
        %v632 = vadd.f32 %v552, %v626
        %v633 = vadd.f32 %v553, %v629
        %v634 = vld [vmem:[%s490] sm:$0xe]
        %v635 = vld [vmem:[%s1 + $0x24] sm:$0xf]
        %v636 = vld [vmem:[%s1 + $0x28] sm:$0x3]
        %v638 = vunpack.c.l.b16 %v634
        %v639 = vpack.c.b16 %v563, %v638
        %v640 = vrot.slane %v639, 1
        %v641 = vrot.slane %v566, 1
        %v642 = vsel %vm350, %v640, %v641
        %v645 = vunpack.c.l.b16 %v635
        %v646 = vunpack.c.l.b16 %v636
        %v647 = vpack.c.b16 %v646, %v645
        %v649 = vsel %vm244, %v642, 0
        %v652 = vsel %vm248, %v647, 0
        %654 = vmatprep.subr.bf16.mxu0 0
        %655 = vmatpush1.bf16.msra.mxu0 %v652
        %656 = vmatprep.subr.bf16.mxu0 0
        %657 = vmatpush1.bf16.msra.mxu0 0
        %658 = vmatprep.subr.bf16.mxu0 0
        %659 = vmatpush1.bf16.msra.mxu0 0
        %660 = vmatprep.subr.bf16.mxu0 0
        %661 = vmatpush1.bf16.msra.mxu0 0
        %662 = vmatprep.subr.bf16.mxu0 0
        %663 = vmatpush1.bf16.msra.mxu0 0
        %664 = vmatprep.subr.bf16.mxu0 0
        %665 = vmatpush1.bf16.msra.mxu0 0
        %666 = vmatprep.subr.bf16.mxu0 0
        %667 = vmatpush1.bf16.msra.mxu0 0
        %668 = vmatprep.subr.bf16.mxu0 0
        %669 = vmatpush1.bf16.msra.mxu0 0
        %670 = vmatprep.subr.bf16.mxu0 0
        %671 = vmatpush1.bf16.msra.mxu0 0
        %672 = vmatprep.subr.bf16.mxu0 0
        %673 = vmatpush1.bf16.msra.mxu0 0
        %674 = vmatprep.subr.bf16.mxu0 0
        %675 = vmatpush1.bf16.msra.mxu0 0
        %676 = vmatprep.subr.bf16.mxu0 0
        %677 = vmatpush1.bf16.msra.mxu0 0
        %678 = vmatprep.subr.bf16.mxu0 0
        %679 = vmatpush1.bf16.msra.mxu0 0
        %680 = vmatprep.subr.bf16.mxu0 0
        %681 = vmatpush1.bf16.msra.mxu0 0
        %682 = vmatprep.subr.bf16.mxu0 0
        %683 = vmatpush1.bf16.msra.mxu0 0
        %684 = vmatprep.subr.bf16.mxu0 0
        %685 = vmatpush1.bf16.msra.mxu0 0
        %686 = vmatprep.mubr.bf16.mxu0 0
        %687 = vmatmul.mubr.bf16.gmra.mrb[0].mxu0 %v649
        %v688 = vpop.f32.mrb[0].mxu0
        %v689 = vadd.f32 0.0, %v688
        %v690 = vpop.f32.mrb[0].mxu0
        %v691 = vpop.f32.mrb[0].mxu0
        %v692 = vadd.f32 0.0, %v691
        %v693 = vpop.f32.mrb[0].mxu0
        %694 = vdwg.mxu0
        %v695 = vadd.f32 %v632, %v689
        %v696 = vadd.f32 %v633, %v692
        %v697 = vld [vmem:[%s490 + $0x8] sm:$0x3]
        %v698 = vld [vmem:[%s1 + $0x28] sm:$0xc]
        %v699 = vld [vmem:[%s1 + $0x2c] sm:$0xf]
        %v701 = vunpack.c.l.b16 %v697
        %v702 = vpack.c.b16 %v701, %v701
        %v704 = vshrl.u32 %v639, 16
        %v706 = vrot.slane %v704, 1
        %v707 = vshll.u32 %v639, 16
        %v709 = vrot.slane %v707, 2
        %v710 = vor.u32 %v706, %v709
        %v712 = vshrl.u32 %v702, 16
        %v714 = vrot.slane %v712, 1
        %v715 = vshll.u32 %v702, 16
        %v717 = vrot.slane %v715, 2
        %v718 = vor.u32 %v714, %v717
        %v719 = vsel %vm414, %v710, %v718
        %v722 = vunpack.c.l.b16 %v698
        %v723 = vunpack.c.l.b16 %v699
        %v724 = vpack.c.b16 %v723, %v722
        %v725 = vrot.slane %v724, 2
        %v727 = vsel %vm244, %v719, 0
        %v730 = vsel %vm248, %v725, 0
        %732 = vmatprep.subr.bf16.mxu0 0
        %733 = vmatpush1.bf16.msra.mxu0 %v730
        %734 = vmatprep.subr.bf16.mxu0 0
        %735 = vmatpush1.bf16.msra.mxu0 0
        %736 = vmatprep.subr.bf16.mxu0 0
        %737 = vmatpush1.bf16.msra.mxu0 0
        %738 = vmatprep.subr.bf16.mxu0 0
        %739 = vmatpush1.bf16.msra.mxu0 0
        %740 = vmatprep.subr.bf16.mxu0 0
        %741 = vmatpush1.bf16.msra.mxu0 0
        %742 = vmatprep.subr.bf16.mxu0 0
        %743 = vmatpush1.bf16.msra.mxu0 0
        %744 = vmatprep.subr.bf16.mxu0 0
        %745 = vmatpush1.bf16.msra.mxu0 0
        %746 = vmatprep.subr.bf16.mxu0 0
        %747 = vmatpush1.bf16.msra.mxu0 0
        %748 = vmatprep.subr.bf16.mxu0 0
        %749 = vmatpush1.bf16.msra.mxu0 0
        %750 = vmatprep.subr.bf16.mxu0 0
        %751 = vmatpush1.bf16.msra.mxu0 0
        %752 = vmatprep.subr.bf16.mxu0 0
        %753 = vmatpush1.bf16.msra.mxu0 0
        %754 = vmatprep.subr.bf16.mxu0 0
        %755 = vmatpush1.bf16.msra.mxu0 0
        %756 = vmatprep.subr.bf16.mxu0 0
        %757 = vmatpush1.bf16.msra.mxu0 0
        %758 = vmatprep.subr.bf16.mxu0 0
        %759 = vmatpush1.bf16.msra.mxu0 0
        %760 = vmatprep.subr.bf16.mxu0 0
        %761 = vmatpush1.bf16.msra.mxu0 0
        %762 = vmatprep.subr.bf16.mxu0 0
        %763 = vmatpush1.bf16.msra.mxu0 0
        %764 = vmatprep.mubr.bf16.mxu0 0
        %765 = vmatmul.mubr.bf16.gmra.mrb[0].mxu0 %v727
        %v766 = vpop.f32.mrb[0].mxu0
        %v767 = vadd.f32 0.0, %v766
        %v768 = vpop.f32.mrb[0].mxu0
        %v769 = vpop.f32.mrb[0].mxu0
        %v770 = vadd.f32 0.0, %v769
        %v771 = vpop.f32.mrb[0].mxu0
        %772 = vdwg.mxu0
        %v773 = vadd.f32 %v695, %v767
        %v774 = vadd.f32 %v696, %v770
        %s775 = sadd.s32 %s202, 2
        %s776 = smul.u32 %s775, 3
        %s777 = smul.addr %s776, 4
        %s778 = scalar_lea.vmem %s192, %s777
        %v779 = vld [vmem:[%s778] sm:$0xf]
        %v780 = vld [vmem:[%s778 + $0x4] sm:$0xf]
        %v781 = vld [vmem:[%s1 + $0x30] sm:$0xf]
        %v782 = vld [vmem:[%s1 + $0x34] sm:$0x3]
        %v785 = vunpack.c.l.b16 %v779
        %v786 = vunpack.c.l.b16 %v780
        %v787 = vpack.c.b16 %v786, %v785
        %v790 = vunpack.c.l.b16 %v781
        %v791 = vunpack.c.l.b16 %v782
        %v792 = vpack.c.b16 %v791, %v790
        %v794 = vsel %vm244, %v787, 0
        %v797 = vsel %vm248, %v792, 0
        %799 = vmatprep.subr.bf16.mxu0 0
        %800 = vmatpush1.bf16.msra.mxu0 %v797
        %801 = vmatprep.subr.bf16.mxu0 0
        %802 = vmatpush1.bf16.msra.mxu0 0
        %803 = vmatprep.subr.bf16.mxu0 0
        %804 = vmatpush1.bf16.msra.mxu0 0
        %805 = vmatprep.subr.bf16.mxu0 0
        %806 = vmatpush1.bf16.msra.mxu0 0
        %807 = vmatprep.subr.bf16.mxu0 0
        %808 = vmatpush1.bf16.msra.mxu0 0
        %809 = vmatprep.subr.bf16.mxu0 0
        %810 = vmatpush1.bf16.msra.mxu0 0
        %811 = vmatprep.subr.bf16.mxu0 0
        %812 = vmatpush1.bf16.msra.mxu0 0
        %813 = vmatprep.subr.bf16.mxu0 0
        %814 = vmatpush1.bf16.msra.mxu0 0
        %815 = vmatprep.subr.bf16.mxu0 0
        %816 = vmatpush1.bf16.msra.mxu0 0
        %817 = vmatprep.subr.bf16.mxu0 0
        %818 = vmatpush1.bf16.msra.mxu0 0
        %819 = vmatprep.subr.bf16.mxu0 0
        %820 = vmatpush1.bf16.msra.mxu0 0
        %821 = vmatprep.subr.bf16.mxu0 0
        %822 = vmatpush1.bf16.msra.mxu0 0
        %823 = vmatprep.subr.bf16.mxu0 0
        %824 = vmatpush1.bf16.msra.mxu0 0
        %825 = vmatprep.subr.bf16.mxu0 0
        %826 = vmatpush1.bf16.msra.mxu0 0
        %827 = vmatprep.subr.bf16.mxu0 0
        %828 = vmatpush1.bf16.msra.mxu0 0
        %829 = vmatprep.subr.bf16.mxu0 0
        %830 = vmatpush1.bf16.msra.mxu0 0
        %831 = vmatprep.mubr.bf16.mxu0 0
        %832 = vmatmul.mubr.bf16.gmra.mrb[0].mxu0 %v794
        %v833 = vpop.f32.mrb[0].mxu0
        %v834 = vadd.f32 0.0, %v833
        %v835 = vpop.f32.mrb[0].mxu0
        %v836 = vpop.f32.mrb[0].mxu0
        %v837 = vadd.f32 0.0, %v836
        %v838 = vpop.f32.mrb[0].mxu0
        %839 = vdwg.mxu0
        %v840 = vadd.f32 %v773, %v834
        %v841 = vadd.f32 %v774, %v837
        %v842 = vld [vmem:[%s778] sm:$0xf]
        %v843 = vld [vmem:[%s778 + $0x4] sm:$0xf]
        %v844 = vld [vmem:[%s778 + $0x8] sm:$0x1]
        %v845 = vld [vmem:[%s1 + $0x34] sm:$0xc]
        %v846 = vld [vmem:[%s1 + $0x38] sm:$0xf]
        %v850 = vunpack.c.l.b16 %v842
        %v851 = vunpack.c.l.b16 %v843
        %v852 = vunpack.c.l.b16 %v844
        %v853 = vpack.c.b16 %v851, %v850
        %v854 = vpack.c.b16 %v852, %v852
        %v856 = vshrl.u32 %v853, 16
        %v858 = vshll.u32 %v853, 16
        %v860 = vrot.slane %v858, 1
        %v861 = vor.u32 %v856, %v860
        %v863 = vshll.u32 %v854, 16
        %v865 = vrot.slane %v863, 1
        %v866 = vsel %vm225, %v861, %v865
        %v869 = vunpack.c.l.b16 %v845
        %v870 = vunpack.c.l.b16 %v846
        %v871 = vpack.c.b16 %v870, %v869
        %v872 = vrot.slane %v871, 2
        %v874 = vsel %vm244, %v866, 0
        %v877 = vsel %vm248, %v872, 0
        %879 = vmatprep.subr.bf16.mxu0 0
        %880 = vmatpush1.bf16.msra.mxu0 %v877
        %881 = vmatprep.subr.bf16.mxu0 0
        %882 = vmatpush1.bf16.msra.mxu0 0
        %883 = vmatprep.subr.bf16.mxu0 0
        %884 = vmatpush1.bf16.msra.mxu0 0
        %885 = vmatprep.subr.bf16.mxu0 0
        %886 = vmatpush1.bf16.msra.mxu0 0
        %887 = vmatprep.subr.bf16.mxu0 0
        %888 = vmatpush1.bf16.msra.mxu0 0
        %889 = vmatprep.subr.bf16.mxu0 0
        %890 = vmatpush1.bf16.msra.mxu0 0
        %891 = vmatprep.subr.bf16.mxu0 0
        %892 = vmatpush1.bf16.msra.mxu0 0
        %893 = vmatprep.subr.bf16.mxu0 0
        %894 = vmatpush1.bf16.msra.mxu0 0
        %895 = vmatprep.subr.bf16.mxu0 0
        %896 = vmatpush1.bf16.msra.mxu0 0
        %897 = vmatprep.subr.bf16.mxu0 0
        %898 = vmatpush1.bf16.msra.mxu0 0
        %899 = vmatprep.subr.bf16.mxu0 0
        %900 = vmatpush1.bf16.msra.mxu0 0
        %901 = vmatprep.subr.bf16.mxu0 0
        %902 = vmatpush1.bf16.msra.mxu0 0
        %903 = vmatprep.subr.bf16.mxu0 0
        %904 = vmatpush1.bf16.msra.mxu0 0
        %905 = vmatprep.subr.bf16.mxu0 0
        %906 = vmatpush1.bf16.msra.mxu0 0
        %907 = vmatprep.subr.bf16.mxu0 0
        %908 = vmatpush1.bf16.msra.mxu0 0
        %909 = vmatprep.subr.bf16.mxu0 0
        %910 = vmatpush1.bf16.msra.mxu0 0
        %911 = vmatprep.mubr.bf16.mxu0 0
        %912 = vmatmul.mubr.bf16.gmra.mrb[0].mxu0 %v874
        %v913 = vpop.f32.mrb[0].mxu0
        %v914 = vadd.f32 0.0, %v913
        %v915 = vpop.f32.mrb[0].mxu0
        %v916 = vpop.f32.mrb[0].mxu0
        %v917 = vadd.f32 0.0, %v916
        %v918 = vpop.f32.mrb[0].mxu0
        %919 = vdwg.mxu0
        %v920 = vadd.f32 %v840, %v914
        %v921 = vadd.f32 %v841, %v917
        %v922 = vld [vmem:[%s778] sm:$0xe]
        %v923 = vld [vmem:[%s1 + $0x3c] sm:$0xf]
        %v924 = vld [vmem:[%s1 + $0x40] sm:$0x3]
        %v926 = vunpack.c.l.b16 %v922
        %v927 = vpack.c.b16 %v851, %v926
        %v928 = vrot.slane %v927, 1
        %v929 = vrot.slane %v854, 1
        %v930 = vsel %vm350, %v928, %v929
        %v933 = vunpack.c.l.b16 %v923
        %v934 = vunpack.c.l.b16 %v924
        %v935 = vpack.c.b16 %v934, %v933
        %v937 = vsel %vm244, %v930, 0
        %v940 = vsel %vm248, %v935, 0
        %942 = vmatprep.subr.bf16.mxu0 0
        %943 = vmatpush1.bf16.msra.mxu0 %v940
        %944 = vmatprep.subr.bf16.mxu0 0
        %945 = vmatpush1.bf16.msra.mxu0 0
        %946 = vmatprep.subr.bf16.mxu0 0
        %947 = vmatpush1.bf16.msra.mxu0 0
        %948 = vmatprep.subr.bf16.mxu0 0
        %949 = vmatpush1.bf16.msra.mxu0 0
        %950 = vmatprep.subr.bf16.mxu0 0
        %951 = vmatpush1.bf16.msra.mxu0 0
        %952 = vmatprep.subr.bf16.mxu0 0
        %953 = vmatpush1.bf16.msra.mxu0 0
        %954 = vmatprep.subr.bf16.mxu0 0
        %955 = vmatpush1.bf16.msra.mxu0 0
        %956 = vmatprep.subr.bf16.mxu0 0
        %957 = vmatpush1.bf16.msra.mxu0 0
        %958 = vmatprep.subr.bf16.mxu0 0
        %959 = vmatpush1.bf16.msra.mxu0 0
        %960 = vmatprep.subr.bf16.mxu0 0
        %961 = vmatpush1.bf16.msra.mxu0 0
        %962 = vmatprep.subr.bf16.mxu0 0
        %963 = vmatpush1.bf16.msra.mxu0 0
        %964 = vmatprep.subr.bf16.mxu0 0
        %965 = vmatpush1.bf16.msra.mxu0 0
        %966 = vmatprep.subr.bf16.mxu0 0
        %967 = vmatpush1.bf16.msra.mxu0 0
        %968 = vmatprep.subr.bf16.mxu0 0
        %969 = vmatpush1.bf16.msra.mxu0 0
        %970 = vmatprep.subr.bf16.mxu0 0
        %971 = vmatpush1.bf16.msra.mxu0 0
        %972 = vmatprep.subr.bf16.mxu0 0
        %973 = vmatpush1.bf16.msra.mxu0 0
        %974 = vmatprep.mubr.bf16.mxu0 0
        %975 = vmatmul.mubr.bf16.gmra.mrb[0].mxu0 %v937
        %v976 = vpop.f32.mrb[0].mxu0
        %v977 = vadd.f32 0.0, %v976
        %v978 = vpop.f32.mrb[0].mxu0
        %v979 = vpop.f32.mrb[0].mxu0
        %v980 = vadd.f32 0.0, %v979
        %v981 = vpop.f32.mrb[0].mxu0
        %982 = vdwg.mxu0
        %v983 = vadd.f32 %v920, %v977
        %v984 = vadd.f32 %v921, %v980
        %v985 = vld [vmem:[%s778 + $0x8] sm:$0x3]
        %v986 = vld [vmem:[%s1 + $0x40] sm:$0xc]
        %v987 = vld [vmem:[%s1 + $0x44] sm:$0xf]
        %v989 = vunpack.c.l.b16 %v985
        %v990 = vpack.c.b16 %v989, %v989
        %v992 = vshrl.u32 %v927, 16
        %v994 = vrot.slane %v992, 1
        %v995 = vshll.u32 %v927, 16
        %v997 = vrot.slane %v995, 2
        %v998 = vor.u32 %v994, %v997
        %v1000 = vshrl.u32 %v990, 16
        %v1002 = vrot.slane %v1000, 1
        %v1003 = vshll.u32 %v990, 16
        %v1005 = vrot.slane %v1003, 2
        %v1006 = vor.u32 %v1002, %v1005
        %v1007 = vsel %vm414, %v998, %v1006
        %v1010 = vunpack.c.l.b16 %v986
        %v1011 = vunpack.c.l.b16 %v987
        %v1012 = vpack.c.b16 %v1011, %v1010
        %v1013 = vrot.slane %v1012, 2
        %v1015 = vsel %vm244, %v1007, 0
        %v1018 = vsel %vm248, %v1013, 0
        %1020 = vmatprep.subr.bf16.mxu0 0
        %1021 = vmatpush1.bf16.msra.mxu0 %v1018
        %1022 = vmatprep.subr.bf16.mxu0 0
        %1023 = vmatpush1.bf16.msra.mxu0 0
        %1024 = vmatprep.subr.bf16.mxu0 0
        %1025 = vmatpush1.bf16.msra.mxu0 0
        %1026 = vmatprep.subr.bf16.mxu0 0
        %1027 = vmatpush1.bf16.msra.mxu0 0
        %1028 = vmatprep.subr.bf16.mxu0 0
        %1029 = vmatpush1.bf16.msra.mxu0 0
        %1030 = vmatprep.subr.bf16.mxu0 0
        %1031 = vmatpush1.bf16.msra.mxu0 0
        %1032 = vmatprep.subr.bf16.mxu0 0
        %1033 = vmatpush1.bf16.msra.mxu0 0
        %1034 = vmatprep.subr.bf16.mxu0 0
        %1035 = vmatpush1.bf16.msra.mxu0 0
        %1036 = vmatprep.subr.bf16.mxu0 0
        %1037 = vmatpush1.bf16.msra.mxu0 0
        %1038 = vmatprep.subr.bf16.mxu0 0
        %1039 = vmatpush1.bf16.msra.mxu0 0
        %1040 = vmatprep.subr.bf16.mxu0 0
        %1041 = vmatpush1.bf16.msra.mxu0 0
        %1042 = vmatprep.subr.bf16.mxu0 0
        %1043 = vmatpush1.bf16.msra.mxu0 0
        %1044 = vmatprep.subr.bf16.mxu0 0
        %1045 = vmatpush1.bf16.msra.mxu0 0
        %1046 = vmatprep.subr.bf16.mxu0 0
        %1047 = vmatpush1.bf16.msra.mxu0 0
        %1048 = vmatprep.subr.bf16.mxu0 0
        %1049 = vmatpush1.bf16.msra.mxu0 0
        %1050 = vmatprep.subr.bf16.mxu0 0
        %1051 = vmatpush1.bf16.msra.mxu0 0
        %1052 = vmatprep.mubr.bf16.mxu0 0
        %1053 = vmatmul.mubr.bf16.gmra.mrb[0].mxu0 %v1015
        %v1054 = vpop.f32.mrb[0].mxu0
        %v1055 = vadd.f32 0.0, %v1054
        %v1056 = vpop.f32.mrb[0].mxu0
        %v1057 = vpop.f32.mrb[0].mxu0
        %v1058 = vadd.f32 0.0, %v1057
        %v1059 = vpop.f32.mrb[0].mxu0
        %1060 = vdwg.mxu0
        %v1061 = vadd.f32 %v983, %v1055
        %v1062 = vadd.f32 %v984, %v1058
        %s1063 = sadd.s32 %s202, 3
        %s1064 = smul.u32 %s1063, 3
        %s1065 = smul.addr %s1064, 4
        %s1066 = scalar_lea.vmem %s192, %s1065
        %v1067 = vld [vmem:[%s1066] sm:$0xf]
        %v1068 = vld [vmem:[%s1066 + $0x4] sm:$0xf]
        %v1069 = vld [vmem:[%s1 + $0x48] sm:$0xf]
        %v1070 = vld [vmem:[%s1 + $0x4c] sm:$0x3]
        %v1073 = vunpack.c.l.b16 %v1067
        %v1074 = vunpack.c.l.b16 %v1068
        %v1075 = vpack.c.b16 %v1074, %v1073
        %v1078 = vunpack.c.l.b16 %v1069
        %v1079 = vunpack.c.l.b16 %v1070
        %v1080 = vpack.c.b16 %v1079, %v1078
        %v1082 = vsel %vm244, %v1075, 0
        %v1085 = vsel %vm248, %v1080, 0
        %1087 = vmatprep.subr.bf16.mxu0 0
        %1088 = vmatpush1.bf16.msra.mxu0 %v1085
        %1089 = vmatprep.subr.bf16.mxu0 0
        %1090 = vmatpush1.bf16.msra.mxu0 0
        %1091 = vmatprep.subr.bf16.mxu0 0
        %1092 = vmatpush1.bf16.msra.mxu0 0
        %1093 = vmatprep.subr.bf16.mxu0 0
        %1094 = vmatpush1.bf16.msra.mxu0 0
        %1095 = vmatprep.subr.bf16.mxu0 0
        %1096 = vmatpush1.bf16.msra.mxu0 0
        %1097 = vmatprep.subr.bf16.mxu0 0
        %1098 = vmatpush1.bf16.msra.mxu0 0
        %1099 = vmatprep.subr.bf16.mxu0 0
        %1100 = vmatpush1.bf16.msra.mxu0 0
        %1101 = vmatprep.subr.bf16.mxu0 0
        %1102 = vmatpush1.bf16.msra.mxu0 0
        %1103 = vmatprep.subr.bf16.mxu0 0
        %1104 = vmatpush1.bf16.msra.mxu0 0
        %1105 = vmatprep.subr.bf16.mxu0 0
        %1106 = vmatpush1.bf16.msra.mxu0 0
        %1107 = vmatprep.subr.bf16.mxu0 0
        %1108 = vmatpush1.bf16.msra.mxu0 0
        %1109 = vmatprep.subr.bf16.mxu0 0
        %1110 = vmatpush1.bf16.msra.mxu0 0
        %1111 = vmatprep.subr.bf16.mxu0 0
        %1112 = vmatpush1.bf16.msra.mxu0 0
        %1113 = vmatprep.subr.bf16.mxu0 0
        %1114 = vmatpush1.bf16.msra.mxu0 0
        %1115 = vmatprep.subr.bf16.mxu0 0
        %1116 = vmatpush1.bf16.msra.mxu0 0
        %1117 = vmatprep.subr.bf16.mxu0 0
        %1118 = vmatpush1.bf16.msra.mxu0 0
        %1119 = vmatprep.mubr.bf16.mxu0 0
        %1120 = vmatmul.mubr.bf16.gmra.mrb[0].mxu0 %v1082
        %v1121 = vpop.f32.mrb[0].mxu0
        %v1122 = vadd.f32 0.0, %v1121
        %v1123 = vpop.f32.mrb[0].mxu0
        %v1124 = vpop.f32.mrb[0].mxu0
        %v1125 = vadd.f32 0.0, %v1124
        %v1126 = vpop.f32.mrb[0].mxu0
        %1127 = vdwg.mxu0
        %v1128 = vadd.f32 %v1061, %v1122
        %v1129 = vadd.f32 %v1062, %v1125
        %v1130 = vld [vmem:[%s1066] sm:$0xf]
        %v1131 = vld [vmem:[%s1066 + $0x4] sm:$0xf]
        %v1132 = vld [vmem:[%s1066 + $0x8] sm:$0x1]
        %v1133 = vld [vmem:[%s1 + $0x4c] sm:$0xc]
        %v1134 = vld [vmem:[%s1 + $0x50] sm:$0xf]
        %v1138 = vunpack.c.l.b16 %v1130
        %v1139 = vunpack.c.l.b16 %v1131
        %v1140 = vunpack.c.l.b16 %v1132
        %v1141 = vpack.c.b16 %v1139, %v1138
        %v1142 = vpack.c.b16 %v1140, %v1140
        %v1144 = vshrl.u32 %v1141, 16
        %v1146 = vshll.u32 %v1141, 16
        %v1148 = vrot.slane %v1146, 1
        %v1149 = vor.u32 %v1144, %v1148
        %v1151 = vshll.u32 %v1142, 16
        %v1153 = vrot.slane %v1151, 1
        %v1154 = vsel %vm225, %v1149, %v1153
        %v1157 = vunpack.c.l.b16 %v1133
        %v1158 = vunpack.c.l.b16 %v1134
        %v1159 = vpack.c.b16 %v1158, %v1157
        %v1160 = vrot.slane %v1159, 2
        %v1162 = vsel %vm244, %v1154, 0
        %v1165 = vsel %vm248, %v1160, 0
        %1167 = vmatprep.subr.bf16.mxu0 0
        %1168 = vmatpush1.bf16.msra.mxu0 %v1165
        %1169 = vmatprep.subr.bf16.mxu0 0
        %1170 = vmatpush1.bf16.msra.mxu0 0
        %1171 = vmatprep.subr.bf16.mxu0 0
        %1172 = vmatpush1.bf16.msra.mxu0 0
        %1173 = vmatprep.subr.bf16.mxu0 0
        %1174 = vmatpush1.bf16.msra.mxu0 0
        %1175 = vmatprep.subr.bf16.mxu0 0
        %1176 = vmatpush1.bf16.msra.mxu0 0
        %1177 = vmatprep.subr.bf16.mxu0 0
        %1178 = vmatpush1.bf16.msra.mxu0 0
        %1179 = vmatprep.subr.bf16.mxu0 0
        %1180 = vmatpush1.bf16.msra.mxu0 0
        %1181 = vmatprep.subr.bf16.mxu0 0
        %1182 = vmatpush1.bf16.msra.mxu0 0
        %1183 = vmatprep.subr.bf16.mxu0 0
        %1184 = vmatpush1.bf16.msra.mxu0 0
        %1185 = vmatprep.subr.bf16.mxu0 0
        %1186 = vmatpush1.bf16.msra.mxu0 0
        %1187 = vmatprep.subr.bf16.mxu0 0
        %1188 = vmatpush1.bf16.msra.mxu0 0
        %1189 = vmatprep.subr.bf16.mxu0 0
        %1190 = vmatpush1.bf16.msra.mxu0 0
        %1191 = vmatprep.subr.bf16.mxu0 0
        %1192 = vmatpush1.bf16.msra.mxu0 0
        %1193 = vmatprep.subr.bf16.mxu0 0
        %1194 = vmatpush1.bf16.msra.mxu0 0
        %1195 = vmatprep.subr.bf16.mxu0 0
        %1196 = vmatpush1.bf16.msra.mxu0 0
        %1197 = vmatprep.subr.bf16.mxu0 0
        %1198 = vmatpush1.bf16.msra.mxu0 0
        %1199 = vmatprep.mubr.bf16.mxu0 0
        %1200 = vmatmul.mubr.bf16.gmra.mrb[0].mxu0 %v1162
        %v1201 = vpop.f32.mrb[0].mxu0
        %v1202 = vadd.f32 0.0, %v1201
        %v1203 = vpop.f32.mrb[0].mxu0
        %v1204 = vpop.f32.mrb[0].mxu0
        %v1205 = vadd.f32 0.0, %v1204
        %v1206 = vpop.f32.mrb[0].mxu0
        %1207 = vdwg.mxu0
        %v1208 = vadd.f32 %v1128, %v1202
        %v1209 = vadd.f32 %v1129, %v1205
        %v1210 = vld [vmem:[%s1066] sm:$0xe]
        %v1211 = vld [vmem:[%s1 + $0x54] sm:$0xf]
        %v1212 = vld [vmem:[%s1 + $0x58] sm:$0x3]
        %v1214 = vunpack.c.l.b16 %v1210
        %v1215 = vpack.c.b16 %v1139, %v1214
        %v1216 = vrot.slane %v1215, 1
        %v1217 = vrot.slane %v1142, 1
        %v1218 = vsel %vm350, %v1216, %v1217
        %v1221 = vunpack.c.l.b16 %v1211
        %v1222 = vunpack.c.l.b16 %v1212
        %v1223 = vpack.c.b16 %v1222, %v1221
        %v1225 = vsel %vm244, %v1218, 0
        %v1228 = vsel %vm248, %v1223, 0
        %1230 = vmatprep.subr.bf16.mxu0 0
        %1231 = vmatpush1.bf16.msra.mxu0 %v1228
        %1232 = vmatprep.subr.bf16.mxu0 0
        %1233 = vmatpush1.bf16.msra.mxu0 0
        %1234 = vmatprep.subr.bf16.mxu0 0
        %1235 = vmatpush1.bf16.msra.mxu0 0
        %1236 = vmatprep.subr.bf16.mxu0 0
        %1237 = vmatpush1.bf16.msra.mxu0 0
        %1238 = vmatprep.subr.bf16.mxu0 0
        %1239 = vmatpush1.bf16.msra.mxu0 0
        %1240 = vmatprep.subr.bf16.mxu0 0
        %1241 = vmatpush1.bf16.msra.mxu0 0
        %1242 = vmatprep.subr.bf16.mxu0 0
        %1243 = vmatpush1.bf16.msra.mxu0 0
        %1244 = vmatprep.subr.bf16.mxu0 0
        %1245 = vmatpush1.bf16.msra.mxu0 0
        %1246 = vmatprep.subr.bf16.mxu0 0
        %1247 = vmatpush1.bf16.msra.mxu0 0
        %1248 = vmatprep.subr.bf16.mxu0 0
        %1249 = vmatpush1.bf16.msra.mxu0 0
        %1250 = vmatprep.subr.bf16.mxu0 0
        %1251 = vmatpush1.bf16.msra.mxu0 0
        %1252 = vmatprep.subr.bf16.mxu0 0
        %1253 = vmatpush1.bf16.msra.mxu0 0
        %1254 = vmatprep.subr.bf16.mxu0 0
        %1255 = vmatpush1.bf16.msra.mxu0 0
        %1256 = vmatprep.subr.bf16.mxu0 0
        %1257 = vmatpush1.bf16.msra.mxu0 0
        %1258 = vmatprep.subr.bf16.mxu0 0
        %1259 = vmatpush1.bf16.msra.mxu0 0
        %1260 = vmatprep.subr.bf16.mxu0 0
        %1261 = vmatpush1.bf16.msra.mxu0 0
        %1262 = vmatprep.mubr.bf16.mxu0 0
        %1263 = vmatmul.mubr.bf16.gmra.mrb[0].mxu0 %v1225
        %v1264 = vpop.f32.mrb[0].mxu0
        %v1265 = vadd.f32 0.0, %v1264
        %v1266 = vpop.f32.mrb[0].mxu0
        %v1267 = vpop.f32.mrb[0].mxu0
        %v1268 = vadd.f32 0.0, %v1267
        %v1269 = vpop.f32.mrb[0].mxu0
        %1270 = vdwg.mxu0
        %v1271 = vadd.f32 %v1208, %v1265
        %v1272 = vadd.f32 %v1209, %v1268
        %v1273 = vld [vmem:[%s1066 + $0x8] sm:$0x3]
        %v1274 = vld [vmem:[%s1 + $0x58] sm:$0xc]
        %v1275 = vld [vmem:[%s1 + $0x5c] sm:$0xf]
        %v1277 = vunpack.c.l.b16 %v1273
        %v1278 = vpack.c.b16 %v1277, %v1277
        %v1280 = vshrl.u32 %v1215, 16
        %v1282 = vrot.slane %v1280, 1
        %v1283 = vshll.u32 %v1215, 16
        %v1285 = vrot.slane %v1283, 2
        %v1286 = vor.u32 %v1282, %v1285
        %v1288 = vshrl.u32 %v1278, 16
        %v1290 = vrot.slane %v1288, 1
        %v1291 = vshll.u32 %v1278, 16
        %v1293 = vrot.slane %v1291, 2
        %v1294 = vor.u32 %v1290, %v1293
        %v1295 = vsel %vm414, %v1286, %v1294
        %v1298 = vunpack.c.l.b16 %v1274
        %v1299 = vunpack.c.l.b16 %v1275
        %v1300 = vpack.c.b16 %v1299, %v1298
        %v1301 = vrot.slane %v1300, 2
        %v1303 = vsel %vm244, %v1295, 0
        %v1306 = vsel %vm248, %v1301, 0
        %1308 = vmatprep.subr.bf16.mxu0 0
        %1309 = vmatpush1.bf16.msra.mxu0 %v1306
        %1310 = vmatprep.subr.bf16.mxu0 0
        %1311 = vmatpush1.bf16.msra.mxu0 0
        %1312 = vmatprep.subr.bf16.mxu0 0
        %1313 = vmatpush1.bf16.msra.mxu0 0
        %1314 = vmatprep.subr.bf16.mxu0 0
        %1315 = vmatpush1.bf16.msra.mxu0 0
        %1316 = vmatprep.subr.bf16.mxu0 0
        %1317 = vmatpush1.bf16.msra.mxu0 0
        %1318 = vmatprep.subr.bf16.mxu0 0
        %1319 = vmatpush1.bf16.msra.mxu0 0
        %1320 = vmatprep.subr.bf16.mxu0 0
        %1321 = vmatpush1.bf16.msra.mxu0 0
        %1322 = vmatprep.subr.bf16.mxu0 0
        %1323 = vmatpush1.bf16.msra.mxu0 0
        %1324 = vmatprep.subr.bf16.mxu0 0
        %1325 = vmatpush1.bf16.msra.mxu0 0
        %1326 = vmatprep.subr.bf16.mxu0 0
        %1327 = vmatpush1.bf16.msra.mxu0 0
        %1328 = vmatprep.subr.bf16.mxu0 0
        %1329 = vmatpush1.bf16.msra.mxu0 0
        %1330 = vmatprep.subr.bf16.mxu0 0
        %1331 = vmatpush1.bf16.msra.mxu0 0
        %1332 = vmatprep.subr.bf16.mxu0 0
        %1333 = vmatpush1.bf16.msra.mxu0 0
        %1334 = vmatprep.subr.bf16.mxu0 0
        %1335 = vmatpush1.bf16.msra.mxu0 0
        %1336 = vmatprep.subr.bf16.mxu0 0
        %1337 = vmatpush1.bf16.msra.mxu0 0
        %1338 = vmatprep.subr.bf16.mxu0 0
        %1339 = vmatpush1.bf16.msra.mxu0 0
        %1340 = vmatprep.mubr.bf16.mxu0 0
        %1341 = vmatmul.mubr.bf16.gmra.mrb[0].mxu0 %v1303
        %v1342 = vpop.f32.mrb[0].mxu0
        %v1343 = vadd.f32 0.0, %v1342
        %v1344 = vpop.f32.mrb[0].mxu0
        %v1345 = vpop.f32.mrb[0].mxu0
        %v1346 = vadd.f32 0.0, %v1345
        %v1347 = vpop.f32.mrb[0].mxu0
        %1348 = vdwg.mxu0
        %v1349 = vadd.f32 %v1271, %v1343
        %v1350 = vadd.f32 %v1272, %v1346
        %v1352 = vlaneseq
        %v1353 = vshrl.u32 %v1352, 7
        %v1354 = vsub.s32 0, %v1353
        %v1355 = vrot.slane %v199, %v1354
        %v1357 = vmul.f32 %v1349, %v1355
        %v1358 = vmul.f32 %v1350, %v1355
        %v1360 = vlaneseq
        %v1361 = vshrl.u32 %v1360, 7
        %v1362 = vsub.s32 0, %v1361
        %v1363 = vrot.slane %v200, %v1362
        %v1365 = vadd.f32 %v1357, %v1363
        %v1366 = vadd.f32 %v1358, %v1363
        %v1367 = vmax.f32 %v1365, 0.0
        %v1368 = vmax.f32 %v1366, 0.0
        %v1369 = vpack.c.bf16 %v1368, %v1367
        %v1371 = vunpack.c.l.b16 %v1369
        %v1372 = vunpack.c.h.b16 %v1369
        %v1373 = vpack.c.b16 %v1371, %v1371
        %v1374 = vpack.c.b16 %v1372, %v1372
        %s1377 = smul.u32 %s202, 2
        %s1378 = smul.addr %s1377, 4
        %s1379 = scalar_lea.vmem %s197, %s1378
        %vm1380 = vcmask 60416
        %1381 = vst.msk [vmem:[%s1379] sm:$0xf] %vm1380, %v1373
        %1382 = vst.msk [vmem:[%s1379 + $0x4] sm:$0xf] %vm1380, %v1374
      $region41: #{tpu_custom_call.1} parent=35 // loop_footer
        %s206 = sadd.s32 1, %s202
      $region42: #{tpu_custom_call.1} parent=35 // loop_footer_branch
        %201 = sbr.rel target = $region38
      $region43: #{tpu_custom_call.1} parent=35 // loop_exit
        _
      %p1383 = scmp.lt.s32.totalorder %s15, 1
      %s1384 = scalar_select %p1383, %s15, 1
      %s1385 = smul.addr %s1384, 32
      %s1386 = smul.addr %s1385, 4
      %s1387 = scalar_lea.vmem %s4, %s1386
      // Predicated region
      $region44: #{tpu_custom_call.1} parent=35 // pred_check
        %p1388 = pneg %p122
      $region45: #{tpu_custom_call.1} parent=35 // pred_check_branch
        %1390 = sbr.rel (%p1388) target = $region47
      $region46: #{tpu_custom_call.1} parent=35 // pred_region
        _
      $region47: #{tpu_custom_call.1} parent=35 // pred_fallthru
        _
    $region36: #{tpu_custom_call.1} parent=5 // pred_fallthru
      _
    %p1391 = scmp.le.s32.totalorder 2, %s10
    // Predicated region
    $region48: #{tpu_custom_call.1} parent=5 // pred_check
      %p1392 = pneg %p1391
    $region49: #{tpu_custom_call.1} parent=5 // pred_check_branch
      %1394 = sbr.rel (%p1392) target = $region51
    $region50: #{tpu_custom_call.1} parent=5 // pred_region
      %s1395 = ssub.s32 %s10, 2
      // Predicated region
      $region52: #{tpu_custom_call.1} parent=50 // pred_check
        %p1396 = pneg %p128
      $region53: #{tpu_custom_call.1} parent=50 // pred_check_branch
        %1398 = sbr.rel (%p1396) target = $region55
      $region54: #{tpu_custom_call.1} parent=50 // pred_region
        %p1399 = scmp.lt.s32.totalorder %s16, 1
        %s1400 = scalar_select %p1399, %s16, 1
        %s1401 = smul.addr %s1400, 32
        %s1402 = smul.addr %s1401, 4
        %s1403 = scalar_lea.vmem %s4, %s1402
      $region55: #{tpu_custom_call.1} parent=50 // pred_fallthru
        _
    $region51: #{tpu_custom_call.1} parent=5 // pred_fallthru
      _
  $region6: #{tpu_custom_call.1} parent=0 // loop_footer
    %s14 = sadd.s32 1, %s10
  $region7: #{tpu_custom_call.1} parent=0 // loop_footer_branch
    %9 = sbr.rel target = $region3
  $region8: #{tpu_custom_call.1} parent=0 // loop_exit
    _

</llo_original>
